<compile_context>
chip_gen: v6e
topology: v6e:2x2x1
jax: 0.10.0
libtpu: 0.0.40
codegen_flags: <defaults>
</compile_context>

<pallas_src>
import functools

import jax
import jax.numpy as jnp
from jax import lax
from jax.experimental import pallas as pl
from jax.experimental.pallas import tpu as pltpu

EPS = 1e-5
LANE = 128
ROW_TILE = 8                      # output rows per im2col/matmul chunk
VMEM_LIMIT = 32 * 1024 * 1024


def _round_up(x, m):
    return (x + m - 1) // m * m


# ---------------------------------------------------------------------------
# Fused (optional maxpool / BN-affine+ReLU on the input) -> conv3x3 -> stats.
# ---------------------------------------------------------------------------
def conv_stats_kernel(x_ref, scale_ref, shift_ref, w_ref, y_ref, stats_ref, *,
                      pool_input, apply_relu):
    # x_ref     : (1, Hin, Wo, Cx)   activation block (layer1: W-pairs pre-merged
    #                                into channels by a free metadata reshape)
    # scale_ref : (1, Cin) f32       per-channel scale (BN of previous layer)
    # shift_ref : (1, Cin) f32       per-channel shift
    # w_ref     : (9*Cin, Cp) bf16   conv weights, row = (dy*3+dx)*Cin + cin
    # y_ref     : (1, Ho, Wo, Cp)    raw (pre-BN) conv output, bf16
    # stats_ref : (1, 2, Cp) f32     row 0 = sum, row 1 = sum of squares
    Cp = y_ref.shape[-1]
    Ho, Wo = y_ref.shape[1], y_ref.shape[2]
    Cin = scale_ref.shape[-1]

    x = x_ref[0].astype(jnp.float32)

    if pool_input:
        # 2x2/stride-2 max pool.  W-pairs live in the channel dim (lane slices),
        # H-pairs are undone with a leading-dim split -- no strided loads.
        xw = jnp.maximum(x[:, :, :Cin], x[:, :, Cin:])        # (2*Ho, Wo, Cin)
        xh = xw.reshape(Ho, 2, Wo, Cin)
        x = jnp.maximum(xh[:, 0], xh[:, 1])                   # (Ho, Wo, Cin)

    x = x * scale_ref[...] + shift_ref[...]                   # prev-layer BN affine
    if apply_relu:
        x = jnp.maximum(x, 0.0)
    xb = x.astype(jnp.bfloat16)

    # Zero halo for conv padding=1, built entirely in VMEM (no HBM pad pass).
    zrow = jnp.zeros((1, Wo, Cin), jnp.bfloat16)
    zcol = jnp.zeros((Ho + 2, 1, Cin), jnp.bfloat16)
    xp = jnp.concatenate([zrow, xb, zrow], axis=0)
    xp = jnp.concatenate([zcol, xp, zcol], axis=1)            # (Ho+2, Wo+2, Cin)

    w = w_ref[...]                                            # (9*Cin, Cp) bf16
    s = jnp.zeros((1, Cp), jnp.float32)
    s2 = jnp.zeros((1, Cp), jnp.float32)

    r0 = 0
    while r0 < Ho:                                            # static row chunks
        th = min(ROW_TILE, Ho - r0)
        taps = [xp[r0 + dy:r0 + dy + th, dx:dx + Wo, :]
                for dy in range(3) for dx in range(3)]
        patch = jnp.concatenate(taps, axis=-1).reshape(th * Wo, 9 * Cin)
        acc = jnp.dot(patch, w, preferred_element_type=jnp.float32)  # (th*Wo, Cp)
        s = s + jnp.sum(acc, axis=0, keepdims=True)
        s2 = s2 + jnp.sum(acc * acc, axis=0, keepdims=True)
        y_ref[0, r0:r0 + th] = acc.reshape(th, Wo, Cp).astype(y_ref.dtype)
        r0 += th

    stats_ref[0] = jnp.concatenate([s, s2], axis=0)


def _conv3x3_stats(x, scale, shift, w_flat, *, out_hw, pool_input, apply_relu):
    N = x.shape[0]
    Ho, Wo = out_hw
    Cp = w_flat.shape[-1]
    cin = scale.shape[-1]
    in_block = (1,) + x.shape[1:]
    kern = functools.partial(conv_stats_kernel, pool_input=pool_input,
                             apply_relu=apply_relu)
    y, stats = pl.pallas_call(
        kern,
        grid=(N,),
        in_specs=[
            pl.BlockSpec(in_block, lambda n: (n, 0, 0, 0)),
            pl.BlockSpec((1, cin), lambda n: (0, 0)),
            pl.BlockSpec((1, cin), lambda n: (0, 0)),
            pl.BlockSpec(w_flat.shape, lambda n: (0, 0)),
        ],
        out_specs=[
            pl.BlockSpec((1, Ho, Wo, Cp), lambda n: (n, 0, 0, 0)),
            pl.BlockSpec((1, 2, Cp), lambda n: (n, 0, 0)),
        ],
        out_shape=[
            jax.ShapeDtypeStruct((N, Ho, Wo, Cp), jnp.bfloat16),
            jax.ShapeDtypeStruct((N, 2, Cp), jnp.float32),
        ],
        compiler_params=pltpu.CompilerParams(
            dimension_semantics=("parallel",),
            vmem_limit_bytes=VMEM_LIMIT),
    )(x, scale, shift, w_flat)
    return y, stats


# ---------------------------------------------------------------------------
# Final BN + ReLU epilogue (stats of conv2 are only known after its full pass).
# ---------------------------------------------------------------------------
def bn_relu_kernel(y_ref, scale_ref, shift_ref, o_ref):
    y = y_ref[0].astype(jnp.float32)
    o_ref[0] = jnp.maximum(y * scale_ref[...] + shift_ref[...],
                           0.0).astype(o_ref.dtype)


def _bn_relu(y, scale, shift, out_dtype):
    N, Ho, Wo, Cp = y.shape
    return pl.pallas_call(
        bn_relu_kernel,
        grid=(N,),
        in_specs=[
            pl.BlockSpec((1, Ho, Wo, Cp), lambda n: (n, 0, 0, 0)),
            pl.BlockSpec((1, Cp), lambda n: (0, 0)),
            pl.BlockSpec((1, Cp), lambda n: (0, 0)),
        ],
        out_specs=pl.BlockSpec((1, Ho, Wo, Cp), lambda n: (n, 0, 0, 0)),
        out_shape=jax.ShapeDtypeStruct((N, Ho, Wo, Cp), out_dtype),
        compiler_params=pltpu.CompilerParams(
            dimension_semantics=("parallel",),
            vmem_limit_bytes=VMEM_LIMIT),
    )(y, scale, shift)


# ---------------------------------------------------------------------------
# Parameter prep / BN finalization (tiny O(C) glue in plain JAX).
# ---------------------------------------------------------------------------
def _prep_weights(w_oihw, cin_pad, cout_pad):
    cout, cin = w_oihw.shape[0], w_oihw.shape[1]
    w = jnp.pad(w_oihw, ((0, cout_pad - cout), (0, cin_pad - cin), (0, 0), (0, 0)))
    # (Cout, Cin, 3, 3) -> (9*Cin, Cout), row index = (dy*3+dx)*Cin + cin
    w = jnp.transpose(w, (2, 3, 1, 0)).reshape(9 * cin_pad, cout_pad)
    return w.astype(jnp.bfloat16)


def _pad_c(v, cp):
    return jnp.pad(v, (0, cp - v.shape[0])).astype(jnp.float32)


def _bn_affine(stats, gamma, beta, count):
    s = jnp.sum(stats[:, 0, :], axis=0)
    s2 = jnp.sum(stats[:, 1, :], axis=0)
    mean = s / count
    var = jnp.maximum(s2 / count - mean * mean, 0.0)   # biased var, f32
    scale = gamma * lax.rsqrt(var + EPS)
    shift = beta - mean * scale
    return scale.reshape(1, -1), shift.reshape(1, -1)


# ---------------------------------------------------------------------------
# DownBlock forward (Pallas path) and a pure-JAX f32 reference.
# ---------------------------------------------------------------------------
@jax.jit
def down_block(x_nchw, w1, b1, g1, be1, w2, b2, g2, be2):
    # Conv biases cancel exactly under training-mode BatchNorm -> dropped.
    del b1, b2
    N, Cin, H, W = x_nchw.shape
    Cout = w1.shape[0]
    Cp = _round_up(Cout, LANE)
    Ho, Wo = H // 2, W // 2

    x = jnp.transpose(x_nchw, (0, 2, 3, 1))            # NCHW -> NHWC (glue)
    # Free metadata reshape: merge W-pairs into channels for the fused max-pool.
    x = x.reshape(N, H, Wo, 2 * Cin)

    w1f = _prep_weights(w1, Cin, Cp)
    w2f = _prep_weights(w2, Cp, Cp)
    g1p, be1p = _pad_c(g1, Cp), _pad_c(be1, Cp)
    g2p, be2p = _pad_c(g2, Cp), _pad_c(be2, Cp)

    ident_scale = jnp.ones((1, Cin), jnp.float32)
    ident_shift = jnp.zeros((1, Cin), jnp.float32)

    # conv1: fused maxpool -> conv3x3 (one K=9*Cin matmul) -> sum/sumsq
    y1, st1 = _conv3x3_stats(x, ident_scale, ident_shift, w1f,
                             out_hw=(Ho, Wo), pool_input=True, apply_relu=False)
    scale1, shift1 = _bn_affine(st1, g1p, be1p, N * Ho * Wo)

    # conv2: fused BN1+ReLU on the input -> conv3x3 -> sum/sumsq
    y2, st2 = _conv3x3_stats(y1, scale1, shift1, w2f,
                             out_hw=(Ho, Wo), pool_input=False, apply_relu=True)
    scale2, shift2 = _bn_affine(st2, g2p, be2p, N * Ho * Wo)

    out = _bn_relu(y2, scale2, shift2, x_nchw.dtype)   # (N, Ho, Wo, Cp)
    out = out[..., :Cout]                              # drop lane padding (glue)
    return jnp.transpose(out, (0, 3, 1, 2))            # NHWC -> NCHW (glue)


def ref_down_block(x, w1, b1, g1, be1, w2, b2, g2, be2):
    x = lax.reduce_window(x, -jnp.inf, lax.max, (1, 1, 2, 2), (1, 1, 2, 2), 'VALID')

    def block(x, w, b, g, be):
        y = lax.conv_general_dilated(
            x, w, window_strides=(1, 1), padding=((1, 1), (1, 1)),
            dimension_numbers=('NCHW', 'OIHW', 'NCHW'))
        y = y + b[None, :, None, None]
        mean = jnp.mean(y, axis=(0, 2, 3), keepdims=True)
        var = jnp.mean(jnp.square(y - mean), axis=(0, 2, 3), keepdims=True)
        y = (y - mean) * lax.rsqrt(var + EPS)
        y = y * g[None, :, None, None] + be[None, :, None, None]
        return jnp.maximum(y, 0.0)

    x = block(x, w1, b1, g1, be1)
    x = block(x, w2, b2, g2, be2)
    return x


def init_params(key, in_channels, out_channels):
    k1, k2, k3, k4 = jax.random.split(key, 4)
    s1 = (in_channels * 9) ** -0.5
    s2 = (out_channels * 9) ** -0.5
    w1 = jax.random.uniform(k1, (out_channels, in_channels, 3, 3), jnp.float32, -s1, s1)
    b1 = jax.random.uniform(k2, (out_channels,), jnp.float32, -s1, s1)
    w2 = jax.random.uniform(k3, (out_channels, out_channels, 3, 3), jnp.float32, -s2, s2)
    b2 = jax.random.uniform(k4, (out_channels,), jnp.float32, -s2, s2)
    g1 = jnp.ones((out_channels,), jnp.float32)
    be1 = jnp.zeros((out_channels,), jnp.float32)
    g2 = jnp.ones((out_channels,), jnp.float32)
    be2 = jnp.zeros((out_channels,), jnp.float32)
    return w1, b1, g1, be1, w2, b2, g2, be2


if __name__ == "__main__":
    key = jax.random.PRNGKey(0)
    kx, kp = jax.random.split(key)

    in_channels, out_channels = 4, 8
    x = jax.random.normal(kx, (2, in_channels, 16, 16), jnp.float32)
    params = init_params(kp, in_channels, out_channels)

    out = jax.block_until_ready(down_block(x, *params))
    ref = ref_down_block(x, *params)

    assert out.shape == (2, out_channels, 8, 8), out.shape
    max_err = float(jnp.max(jnp.abs(out - ref)))
    # bf16 matmul inputs vs f32 reference, amplified by two BatchNorm layers.
    assert jnp.allclose(out, ref, atol=5e-2, rtol=5e-2), max_err

    print("KERNEL_OK")
</pallas_src>

<mosaic_0001>
module attributes {stable_mosaic.version = 11 : i64} {
  func.func @conv_stats_kernel(%arg0: i32, %arg1: memref<1x16x8x8xf32, #tpu.memory_space<vmem>>, %arg2: memref<1x4xf32, #tpu.memory_space<vmem>>, %arg3: memref<1x4xf32, #tpu.memory_space<vmem>>, %arg4: memref<36x128xbf16, #tpu.memory_space<vmem>>, %arg5: memref<1x8x8x128xbf16, #tpu.memory_space<vmem>>, %arg6: memref<1x2x128xf32, #tpu.memory_space<vmem>>) attributes {dimension_semantics = [#tpu.dimension_semantics<parallel>], iteration_bounds = array<i64: 2>, scalar_prefetch = 0 : i64, scratch_operands = 0 : i64, tpu.core_type = #tpu.core_type<tc>, window_params = [{transform_indices = @transform_0, window_bounds = array<i64: 1, 16, 8, 8>}, {pipeline_mode = #tpu.pipeline_mode<synchronous>, transform_indices = @transform_1, window_bounds = array<i64: 1, 4>}, {pipeline_mode = #tpu.pipeline_mode<synchronous>, transform_indices = @transform_2, window_bounds = array<i64: 1, 4>}, {pipeline_mode = #tpu.pipeline_mode<synchronous>, transform_indices = @transform_3, window_bounds = array<i64: 36, 128>}, {transform_indices = @transform_4, window_bounds = array<i64: 1, 8, 8, 128>}, {transform_indices = @transform_5, window_bounds = array<i64: 1, 2, 128>}]} {
    %c0 = arith.constant 0 : index
    %c0_0 = arith.constant 0 : index
    %c0_1 = arith.constant 0 : index
    %c0_2 = arith.constant 0 : index
    %0 = vector.load %arg1[%c0, %c0_0, %c0_1, %c0_2] : memref<1x16x8x8xf32, #tpu.memory_space<vmem>>, vector<1x16x8x8xf32>
    %1 = vector.shape_cast %0 : vector<1x16x8x8xf32> to vector<16x8x8xf32>
    %2 = vector.extract_strided_slice %1 {offsets = [0, 0, 0], sizes = [16, 8, 4], strides = [1, 1, 1]} : vector<16x8x8xf32> to vector<16x8x4xf32>
    %3 = vector.extract_strided_slice %1 {offsets = [0, 0, 4], sizes = [16, 8, 4], strides = [1, 1, 1]} : vector<16x8x8xf32> to vector<16x8x4xf32>
    %4 = arith.maximumf %2, %3 : vector<16x8x4xf32>
    %5 = vector.shape_cast %4 : vector<16x8x4xf32> to vector<8x2x8x4xf32>
    %6 = vector.extract_strided_slice %5 {offsets = [0, 0, 0, 0], sizes = [8, 1, 8, 4], strides = [1, 1, 1, 1]} : vector<8x2x8x4xf32> to vector<8x1x8x4xf32>
    %7 = vector.shape_cast %6 : vector<8x1x8x4xf32> to vector<8x8x4xf32>
    %8 = vector.extract_strided_slice %5 {offsets = [0, 1, 0, 0], sizes = [8, 1, 8, 4], strides = [1, 1, 1, 1]} : vector<8x2x8x4xf32> to vector<8x1x8x4xf32>
    %9 = vector.shape_cast %8 : vector<8x1x8x4xf32> to vector<8x8x4xf32>
    %10 = arith.maximumf %7, %9 : vector<8x8x4xf32>
    %c0_3 = arith.constant 0 : index
    %c0_4 = arith.constant 0 : index
    %11 = vector.load %arg2[%c0_3, %c0_4] : memref<1x4xf32, #tpu.memory_space<vmem>>, vector<1x4xf32>
    %12 = vector.shape_cast %11 : vector<1x4xf32> to vector<1x1x4xf32>
    %13 = vector.broadcast %12 : vector<1x1x4xf32> to vector<8x8x4xf32>
    %14 = arith.mulf %10, %13 : vector<8x8x4xf32>
    %c0_5 = arith.constant 0 : index
    %c0_6 = arith.constant 0 : index
    %15 = vector.load %arg3[%c0_5, %c0_6] : memref<1x4xf32, #tpu.memory_space<vmem>>, vector<1x4xf32>
    %16 = vector.shape_cast %15 : vector<1x4xf32> to vector<1x1x4xf32>
    %17 = vector.broadcast %16 : vector<1x1x4xf32> to vector<8x8x4xf32>
    %18 = arith.addf %14, %17 : vector<8x8x4xf32>
    %19 = arith.truncf %18 : vector<8x8x4xf32> to vector<8x8x4xbf16>
    %cst = arith.constant 0.000000e+00 : bf16
    %20 = vector.broadcast %cst : bf16 to vector<1x8x4xbf16>
    %cst_7 = arith.constant 0.000000e+00 : bf16
    %21 = vector.broadcast %cst_7 : bf16 to vector<10x1x4xbf16>
    %22 = tpu.concatenate %20, %19, %20 in 0 : vector<1x8x4xbf16>, vector<8x8x4xbf16>, vector<1x8x4xbf16> -> vector<10x8x4xbf16>
    %23 = tpu.concatenate %21, %22, %21 in 1 : vector<10x1x4xbf16>, vector<10x8x4xbf16>, vector<10x1x4xbf16> -> vector<10x10x4xbf16>
    %c0_8 = arith.constant 0 : index
    %c0_9 = arith.constant 0 : index
    %24 = vector.load %arg4[%c0_8, %c0_9] : memref<36x128xbf16, #tpu.memory_space<vmem>>, vector<36x128xbf16>
    %cst_10 = arith.constant 0.000000e+00 : f32
    %25 = vector.broadcast %cst_10 : f32 to vector<1x128xf32>
    %cst_11 = arith.constant 0.000000e+00 : f32
    %26 = vector.broadcast %cst_11 : f32 to vector<1x128xf32>
    %27 = vector.extract_strided_slice %23 {offsets = [0, 0, 0], sizes = [8, 8, 4], strides = [1, 1, 1]} : vector<10x10x4xbf16> to vector<8x8x4xbf16>
    %28 = vector.extract_strided_slice %23 {offsets = [0, 1, 0], sizes = [8, 8, 4], strides = [1, 1, 1]} : vector<10x10x4xbf16> to vector<8x8x4xbf16>
    %29 = vector.extract_strided_slice %23 {offsets = [0, 2, 0], sizes = [8, 8, 4], strides = [1, 1, 1]} : vector<10x10x4xbf16> to vector<8x8x4xbf16>
    %30 = vector.extract_strided_slice %23 {offsets = [1, 0, 0], sizes = [8, 8, 4], strides = [1, 1, 1]} : vector<10x10x4xbf16> to vector<8x8x4xbf16>
    %31 = vector.extract_strided_slice %23 {offsets = [1, 1, 0], sizes = [8, 8, 4], strides = [1, 1, 1]} : vector<10x10x4xbf16> to vector<8x8x4xbf16>
    %32 = vector.extract_strided_slice %23 {offsets = [1, 2, 0], sizes = [8, 8, 4], strides = [1, 1, 1]} : vector<10x10x4xbf16> to vector<8x8x4xbf16>
    %33 = vector.extract_strided_slice %23 {offsets = [2, 0, 0], sizes = [8, 8, 4], strides = [1, 1, 1]} : vector<10x10x4xbf16> to vector<8x8x4xbf16>
    %34 = vector.extract_strided_slice %23 {offsets = [2, 1, 0], sizes = [8, 8, 4], strides = [1, 1, 1]} : vector<10x10x4xbf16> to vector<8x8x4xbf16>
    %35 = vector.extract_strided_slice %23 {offsets = [2, 2, 0], sizes = [8, 8, 4], strides = [1, 1, 1]} : vector<10x10x4xbf16> to vector<8x8x4xbf16>
    %36 = tpu.concatenate %27, %28, %29, %30, %31, %32, %33, %34, %35 in 2 : vector<8x8x4xbf16>, vector<8x8x4xbf16>, vector<8x8x4xbf16>, vector<8x8x4xbf16>, vector<8x8x4xbf16>, vector<8x8x4xbf16>, vector<8x8x4xbf16>, vector<8x8x4xbf16>, vector<8x8x4xbf16> -> vector<8x8x36xbf16>
    %37 = vector.shape_cast %36 : vector<8x8x36xbf16> to vector<64x36xbf16>
    %cst_12 = arith.constant dense<0.000000e+00> : vector<64x128xf32>
    %38 = tpu.matmul %37, %24, %cst_12 {dimension_numbers = #tpu.dot_dimension_numbers<[1], [0], [0], [1], [0, 0, 1, 1], [], []>} : vector<64x36xbf16>, vector<36x128xbf16>, vector<64x128xf32> -> vector<64x128xf32>
    %cst_13 = arith.constant dense<0.000000e+00> : vector<128xf32>
    %39 = vector.multi_reduction <add>, %38, %cst_13 [0] : vector<64x128xf32> to vector<128xf32>
    %40 = vector.shape_cast %39 : vector<128xf32> to vector<1x128xf32>
    %41 = arith.addf %25, %40 : vector<1x128xf32>
    %42 = arith.mulf %38, %38 : vector<64x128xf32>
    %cst_14 = arith.constant dense<0.000000e+00> : vector<128xf32>
    %43 = vector.multi_reduction <add>, %42, %cst_14 [0] : vector<64x128xf32> to vector<128xf32>
    %44 = vector.shape_cast %43 : vector<128xf32> to vector<1x128xf32>
    %45 = arith.addf %26, %44 : vector<1x128xf32>
    %46 = vector.shape_cast %38 : vector<64x128xf32> to vector<8x8x128xf32>
    %47 = arith.truncf %46 : vector<8x8x128xf32> to vector<8x8x128xbf16>
    %c0_15 = arith.constant 0 : index
    %c0_16 = arith.constant 0 : index
    %c0_17 = arith.constant 0 : index
    %c0_18 = arith.constant 0 : index
    %48 = vector.load %arg5[%c0_15, %c0_16, %c0_17, %c0_18] : memref<1x8x8x128xbf16, #tpu.memory_space<vmem>>, vector<1x8x8x128xbf16>
    %49 = vector.shape_cast %48 : vector<1x8x8x128xbf16> to vector<8x8x128xbf16>
    %50 = vector.shape_cast %47 : vector<8x8x128xbf16> to vector<1x8x8x128xbf16>
    tpu.vector_store %arg5[%c0_15, %c0_16, %c0_17, %c0_18], %50 {strides = array<i32>} : memref<1x8x8x128xbf16, #tpu.memory_space<vmem>>, vector<1x8x8x128xbf16>,
    %51 = tpu.concatenate %41, %45 in 0 : vector<1x128xf32>, vector<1x128xf32> -> vector<2x128xf32>
    %c0_19 = arith.constant 0 : index
    %c0_20 = arith.constant 0 : index
    %c0_21 = arith.constant 0 : index
    %52 = vector.load %arg6[%c0_19, %c0_20, %c0_21] : memref<1x2x128xf32, #tpu.memory_space<vmem>>, vector<1x2x128xf32>
    %53 = vector.shape_cast %52 : vector<1x2x128xf32> to vector<2x128xf32>
    %54 = vector.shape_cast %51 : vector<2x128xf32> to vector<1x2x128xf32>
    tpu.vector_store %arg6[%c0_19, %c0_20, %c0_21], %54 {strides = array<i32>} : memref<1x2x128xf32, #tpu.memory_space<vmem>>, vector<1x2x128xf32>,
    return
  }
  func.func @transform_0(%arg0: i32) -> (i32, i32, i32, i32) {
    %c0_i32 = arith.constant 0 : i32
    %c0_i32_0 = arith.constant 0 : i32
    %c0_i32_1 = arith.constant 0 : i32
    %c0_i32_2 = arith.constant 0 : i32
    return %arg0, %c0_i32, %c0_i32_0, %c0_i32_1 : i32, i32, i32, i32
  }
  func.func @transform_1(%arg0: i32) -> (i32, i32) {
    %c0_i32 = arith.constant 0 : i32
    %c0_i32_0 = arith.constant 0 : i32
    %c0_i32_1 = arith.constant 0 : i32
    return %c0_i32, %c0_i32_0 : i32, i32
  }
  func.func @transform_2(%arg0: i32) -> (i32, i32) {
    %c0_i32 = arith.constant 0 : i32
    %c0_i32_0 = arith.constant 0 : i32
    %c0_i32_1 = arith.constant 0 : i32
    return %c0_i32, %c0_i32_0 : i32, i32
  }
  func.func @transform_3(%arg0: i32) -> (i32, i32) {
    %c0_i32 = arith.constant 0 : i32
    %c0_i32_0 = arith.constant 0 : i32
    %c0_i32_1 = arith.constant 0 : i32
    return %c0_i32, %c0_i32_0 : i32, i32
  }
  func.func @transform_4(%arg0: i32) -> (i32, i32, i32, i32) {
    %c0_i32 = arith.constant 0 : i32
    %c0_i32_0 = arith.constant 0 : i32
    %c0_i32_1 = arith.constant 0 : i32
    %c0_i32_2 = arith.constant 0 : i32
    return %arg0, %c0_i32, %c0_i32_0, %c0_i32_1 : i32, i32, i32, i32
  }
  func.func @transform_5(%arg0: i32) -> (i32, i32, i32) {
    %c0_i32 = arith.constant 0 : i32
    %c0_i32_0 = arith.constant 0 : i32
    %c0_i32_1 = arith.constant 0 : i32
    return %arg0, %c0_i32, %c0_i32_0 : i32, i32, i32
  }
}

module attributes {stable_mosaic.version = 11 : i64} {
  func.func @conv_stats_kernel(%arg0: i32, %arg1: memref<1x8x8x128xbf16, #tpu.memory_space<vmem>>, %arg2: memref<1x128xf32, #tpu.memory_space<vmem>>, %arg3: memref<1x128xf32, #tpu.memory_space<vmem>>, %arg4: memref<1152x128xbf16, #tpu.memory_space<vmem>>, %arg5: memref<1x8x8x128xbf16, #tpu.memory_space<vmem>>, %arg6: memref<1x2x128xf32, #tpu.memory_space<vmem>>) attributes {dimension_semantics = [#tpu.dimension_semantics<parallel>], iteration_bounds = array<i64: 2>, scalar_prefetch = 0 : i64, scratch_operands = 0 : i64, tpu.core_type = #tpu.core_type<tc>, window_params = [{transform_indices = @transform_0, window_bounds = array<i64: 1, 8, 8, 128>}, {pipeline_mode = #tpu.pipeline_mode<synchronous>, transform_indices = @transform_1, window_bounds = array<i64: 1, 128>}, {pipeline_mode = #tpu.pipeline_mode<synchronous>, transform_indices = @transform_2, window_bounds = array<i64: 1, 128>}, {pipeline_mode = #tpu.pipeline_mode<synchronous>, transform_indices = @transform_3, window_bounds = array<i64: 1152, 128>}, {transform_indices = @transform_4, window_bounds = array<i64: 1, 8, 8, 128>}, {transform_indices = @transform_5, window_bounds = array<i64: 1, 2, 128>}]} {
    %c0 = arith.constant 0 : index
    %c0_0 = arith.constant 0 : index
    %c0_1 = arith.constant 0 : index
    %c0_2 = arith.constant 0 : index
    %0 = vector.load %arg1[%c0, %c0_0, %c0_1, %c0_2] : memref<1x8x8x128xbf16, #tpu.memory_space<vmem>>, vector<1x8x8x128xbf16>
    %1 = vector.shape_cast %0 : vector<1x8x8x128xbf16> to vector<8x8x128xbf16>
    %2 = arith.extf %1 : vector<8x8x128xbf16> to vector<8x8x128xf32>
    %c0_3 = arith.constant 0 : index
    %c0_4 = arith.constant 0 : index
    %3 = vector.load %arg2[%c0_3, %c0_4] : memref<1x128xf32, #tpu.memory_space<vmem>>, vector<1x128xf32>
    %4 = vector.shape_cast %3 : vector<1x128xf32> to vector<1x1x128xf32>
    %5 = vector.broadcast %4 : vector<1x1x128xf32> to vector<8x8x128xf32>
    %6 = arith.mulf %2, %5 : vector<8x8x128xf32>
    %c0_5 = arith.constant 0 : index
    %c0_6 = arith.constant 0 : index
    %7 = vector.load %arg3[%c0_5, %c0_6] : memref<1x128xf32, #tpu.memory_space<vmem>>, vector<1x128xf32>
    %8 = vector.shape_cast %7 : vector<1x128xf32> to vector<1x1x128xf32>
    %9 = vector.broadcast %8 : vector<1x1x128xf32> to vector<8x8x128xf32>
    %10 = arith.addf %6, %9 : vector<8x8x128xf32>
    %cst = arith.constant 0.000000e+00 : f32
    %11 = vector.broadcast %cst : f32 to vector<8x8x128xf32>
    %12 = arith.maximumf %10, %11 : vector<8x8x128xf32>
    %13 = arith.truncf %12 : vector<8x8x128xf32> to vector<8x8x128xbf16>
    %cst_7 = arith.constant 0.000000e+00 : bf16
    %14 = vector.broadcast %cst_7 : bf16 to vector<1x8x128xbf16>
    %cst_8 = arith.constant 0.000000e+00 : bf16
    %15 = vector.broadcast %cst_8 : bf16 to vector<10x1x128xbf16>
    %16 = tpu.concatenate %14, %13, %14 in 0 : vector<1x8x128xbf16>, vector<8x8x128xbf16>, vector<1x8x128xbf16> -> vector<10x8x128xbf16>
    %17 = tpu.concatenate %15, %16, %15 in 1 : vector<10x1x128xbf16>, vector<10x8x128xbf16>, vector<10x1x128xbf16> -> vector<10x10x128xbf16>
    %c0_9 = arith.constant 0 : index
    %c0_10 = arith.constant 0 : index
    %18 = vector.load %arg4[%c0_9, %c0_10] : memref<1152x128xbf16, #tpu.memory_space<vmem>>, vector<1152x128xbf16>
    %cst_11 = arith.constant 0.000000e+00 : f32
    %19 = vector.broadcast %cst_11 : f32 to vector<1x128xf32>
    %cst_12 = arith.constant 0.000000e+00 : f32
    %20 = vector.broadcast %cst_12 : f32 to vector<1x128xf32>
    %21 = vector.extract_strided_slice %17 {offsets = [0, 0, 0], sizes = [8, 8, 128], strides = [1, 1, 1]} : vector<10x10x128xbf16> to vector<8x8x128xbf16>
    %22 = vector.extract_strided_slice %17 {offsets = [0, 1, 0], sizes = [8, 8, 128], strides = [1, 1, 1]} : vector<10x10x128xbf16> to vector<8x8x128xbf16>
    %23 = vector.extract_strided_slice %17 {offsets = [0, 2, 0], sizes = [8, 8, 128], strides = [1, 1, 1]} : vector<10x10x128xbf16> to vector<8x8x128xbf16>
    %24 = vector.extract_strided_slice %17 {offsets = [1, 0, 0], sizes = [8, 8, 128], strides = [1, 1, 1]} : vector<10x10x128xbf16> to vector<8x8x128xbf16>
    %25 = vector.extract_strided_slice %17 {offsets = [1, 1, 0], sizes = [8, 8, 128], strides = [1, 1, 1]} : vector<10x10x128xbf16> to vector<8x8x128xbf16>
    %26 = vector.extract_strided_slice %17 {offsets = [1, 2, 0], sizes = [8, 8, 128], strides = [1, 1, 1]} : vector<10x10x128xbf16> to vector<8x8x128xbf16>
    %27 = vector.extract_strided_slice %17 {offsets = [2, 0, 0], sizes = [8, 8, 128], strides = [1, 1, 1]} : vector<10x10x128xbf16> to vector<8x8x128xbf16>
    %28 = vector.extract_strided_slice %17 {offsets = [2, 1, 0], sizes = [8, 8, 128], strides = [1, 1, 1]} : vector<10x10x128xbf16> to vector<8x8x128xbf16>
    %29 = vector.extract_strided_slice %17 {offsets = [2, 2, 0], sizes = [8, 8, 128], strides = [1, 1, 1]} : vector<10x10x128xbf16> to vector<8x8x128xbf16>
    %30 = tpu.concatenate %21, %22, %23, %24, %25, %26, %27, %28, %29 in 2 : vector<8x8x128xbf16>, vector<8x8x128xbf16>, vector<8x8x128xbf16>, vector<8x8x128xbf16>, vector<8x8x128xbf16>, vector<8x8x128xbf16>, vector<8x8x128xbf16>, vector<8x8x128xbf16>, vector<8x8x128xbf16> -> vector<8x8x1152xbf16>
    %31 = vector.shape_cast %30 : vector<8x8x1152xbf16> to vector<64x1152xbf16>
    %cst_13 = arith.constant dense<0.000000e+00> : vector<64x128xf32>
    %32 = tpu.matmul %31, %18, %cst_13 {dimension_numbers = #tpu.dot_dimension_numbers<[1], [0], [0], [1], [0, 0, 1, 1], [], []>} : vector<64x1152xbf16>, vector<1152x128xbf16>, vector<64x128xf32> -> vector<64x128xf32>
    %cst_14 = arith.constant dense<0.000000e+00> : vector<128xf32>
    %33 = vector.multi_reduction <add>, %32, %cst_14 [0] : vector<64x128xf32> to vector<128xf32>
    %34 = vector.shape_cast %33 : vector<128xf32> to vector<1x128xf32>
    %35 = arith.addf %19, %34 : vector<1x128xf32>
    %36 = arith.mulf %32, %32 : vector<64x128xf32>
    %cst_15 = arith.constant dense<0.000000e+00> : vector<128xf32>
    %37 = vector.multi_reduction <add>, %36, %cst_15 [0] : vector<64x128xf32> to vector<128xf32>
    %38 = vector.shape_cast %37 : vector<128xf32> to vector<1x128xf32>
    %39 = arith.addf %20, %38 : vector<1x128xf32>
    %40 = vector.shape_cast %32 : vector<64x128xf32> to vector<8x8x128xf32>
    %41 = arith.truncf %40 : vector<8x8x128xf32> to vector<8x8x128xbf16>
    %c0_16 = arith.constant 0 : index
    %c0_17 = arith.constant 0 : index
    %c0_18 = arith.constant 0 : index
    %c0_19 = arith.constant 0 : index
    %42 = vector.load %arg5[%c0_16, %c0_17, %c0_18, %c0_19] : memref<1x8x8x128xbf16, #tpu.memory_space<vmem>>, vector<1x8x8x128xbf16>
    %43 = vector.shape_cast %42 : vector<1x8x8x128xbf16> to vector<8x8x128xbf16>
    %44 = vector.shape_cast %41 : vector<8x8x128xbf16> to vector<1x8x8x128xbf16>
    tpu.vector_store %arg5[%c0_16, %c0_17, %c0_18, %c0_19], %44 {strides = array<i32>} : memref<1x8x8x128xbf16, #tpu.memory_space<vmem>>, vector<1x8x8x128xbf16>,
    %45 = tpu.concatenate %35, %39 in 0 : vector<1x128xf32>, vector<1x128xf32> -> vector<2x128xf32>
    %c0_20 = arith.constant 0 : index
    %c0_21 = arith.constant 0 : index
    %c0_22 = arith.constant 0 : index
    %46 = vector.load %arg6[%c0_20, %c0_21, %c0_22] : memref<1x2x128xf32, #tpu.memory_space<vmem>>, vector<1x2x128xf32>
    %47 = vector.shape_cast %46 : vector<1x2x128xf32> to vector<2x128xf32>
    %48 = vector.shape_cast %45 : vector<2x128xf32> to vector<1x2x128xf32>
    tpu.vector_store %arg6[%c0_20, %c0_21, %c0_22], %48 {strides = array<i32>} : memref<1x2x128xf32, #tpu.memory_space<vmem>>, vector<1x2x128xf32>,
    return
  }
  func.func @transform_0(%arg0: i32) -> (i32, i32, i32, i32) {
    %c0_i32 = arith.constant 0 : i32
    %c0_i32_0 = arith.constant 0 : i32
    %c0_i32_1 = arith.constant 0 : i32
    %c0_i32_2 = arith.constant 0 : i32
    return %arg0, %c0_i32, %c0_i32_0, %c0_i32_1 : i32, i32, i32, i32
  }
  func.func @transform_1(%arg0: i32) -> (i32, i32) {
    %c0_i32 = arith.constant 0 : i32
    %c0_i32_0 = arith.constant 0 : i32
    %c0_i32_1 = arith.constant 0 : i32
    return %c0_i32, %c0_i32_0 : i32, i32
  }
  func.func @transform_2(%arg0: i32) -> (i32, i32) {
    %c0_i32 = arith.constant 0 : i32
    %c0_i32_0 = arith.constant 0 : i32
    %c0_i32_1 = arith.constant 0 : i32
    return %c0_i32, %c0_i32_0 : i32, i32
  }
  func.func @transform_3(%arg0: i32) -> (i32, i32) {
    %c0_i32 = arith.constant 0 : i32
    %c0_i32_0 = arith.constant 0 : i32
    %c0_i32_1 = arith.constant 0 : i32
    return %c0_i32, %c0_i32_0 : i32, i32
  }
  func.func @transform_4(%arg0: i32) -> (i32, i32, i32, i32) {
    %c0_i32 = arith.constant 0 : i32
    %c0_i32_0 = arith.constant 0 : i32
    %c0_i32_1 = arith.constant 0 : i32
    %c0_i32_2 = arith.constant 0 : i32
    return %arg0, %c0_i32, %c0_i32_0, %c0_i32_1 : i32, i32, i32, i32
  }
  func.func @transform_5(%arg0: i32) -> (i32, i32, i32) {
    %c0_i32 = arith.constant 0 : i32
    %c0_i32_0 = arith.constant 0 : i32
    %c0_i32_1 = arith.constant 0 : i32
    return %arg0, %c0_i32, %c0_i32_0 : i32, i32, i32
  }
}

module attributes {stable_mosaic.version = 11 : i64} {
  func.func @bn_relu_kernel(%arg0: i32, %arg1: memref<1x8x8x128xbf16, #tpu.memory_space<vmem>>, %arg2: memref<1x128xf32, #tpu.memory_space<vmem>>, %arg3: memref<1x128xf32, #tpu.memory_space<vmem>>, %arg4: memref<1x8x8x128xf32, #tpu.memory_space<vmem>>) attributes {dimension_semantics = [#tpu.dimension_semantics<parallel>], iteration_bounds = array<i64: 2>, scalar_prefetch = 0 : i64, scratch_operands = 0 : i64, tpu.core_type = #tpu.core_type<tc>, window_params = [{transform_indices = @transform_0, window_bounds = array<i64: 1, 8, 8, 128>}, {pipeline_mode = #tpu.pipeline_mode<synchronous>, transform_indices = @transform_1, window_bounds = array<i64: 1, 128>}, {pipeline_mode = #tpu.pipeline_mode<synchronous>, transform_indices = @transform_2, window_bounds = array<i64: 1, 128>}, {transform_indices = @transform_3, window_bounds = array<i64: 1, 8, 8, 128>}]} {
    %c0 = arith.constant 0 : index
    %c0_0 = arith.constant 0 : index
    %c0_1 = arith.constant 0 : index
    %c0_2 = arith.constant 0 : index
    %0 = vector.load %arg1[%c0, %c0_0, %c0_1, %c0_2] : memref<1x8x8x128xbf16, #tpu.memory_space<vmem>>, vector<1x8x8x128xbf16>
    %1 = vector.shape_cast %0 : vector<1x8x8x128xbf16> to vector<8x8x128xbf16>
    %2 = arith.extf %1 : vector<8x8x128xbf16> to vector<8x8x128xf32>
    %c0_3 = arith.constant 0 : index
    %c0_4 = arith.constant 0 : index
    %3 = vector.load %arg2[%c0_3, %c0_4] : memref<1x128xf32, #tpu.memory_space<vmem>>, vector<1x128xf32>
    %4 = vector.shape_cast %3 : vector<1x128xf32> to vector<1x1x128xf32>
    %5 = vector.broadcast %4 : vector<1x1x128xf32> to vector<8x8x128xf32>
    %6 = arith.mulf %2, %5 : vector<8x8x128xf32>
    %c0_5 = arith.constant 0 : index
    %c0_6 = arith.constant 0 : index
    %7 = vector.load %arg3[%c0_5, %c0_6] : memref<1x128xf32, #tpu.memory_space<vmem>>, vector<1x128xf32>
    %8 = vector.shape_cast %7 : vector<1x128xf32> to vector<1x1x128xf32>
    %9 = vector.broadcast %8 : vector<1x1x128xf32> to vector<8x8x128xf32>
    %10 = arith.addf %6, %9 : vector<8x8x128xf32>
    %cst = arith.constant 0.000000e+00 : f32
    %11 = vector.broadcast %cst : f32 to vector<8x8x128xf32>
    %12 = arith.maximumf %10, %11 : vector<8x8x128xf32>
    %c0_7 = arith.constant 0 : index
    %c0_8 = arith.constant 0 : index
    %c0_9 = arith.constant 0 : index
    %c0_10 = arith.constant 0 : index
    %13 = vector.load %arg4[%c0_7, %c0_8, %c0_9, %c0_10] : memref<1x8x8x128xf32, #tpu.memory_space<vmem>>, vector<1x8x8x128xf32>
    %14 = vector.shape_cast %13 : vector<1x8x8x128xf32> to vector<8x8x128xf32>
    %15 = vector.shape_cast %12 : vector<8x8x128xf32> to vector<1x8x8x128xf32>
    tpu.vector_store %arg4[%c0_7, %c0_8, %c0_9, %c0_10], %15 {strides = array<i32>} : memref<1x8x8x128xf32, #tpu.memory_space<vmem>>, vector<1x8x8x128xf32>,
    return
  }
  func.func @transform_0(%arg0: i32) -> (i32, i32, i32, i32) {
    %c0_i32 = arith.constant 0 : i32
    %c0_i32_0 = arith.constant 0 : i32
    %c0_i32_1 = arith.constant 0 : i32
    %c0_i32_2 = arith.constant 0 : i32
    return %arg0, %c0_i32, %c0_i32_0, %c0_i32_1 : i32, i32, i32, i32
  }
  func.func @transform_1(%arg0: i32) -> (i32, i32) {
    %c0_i32 = arith.constant 0 : i32
    %c0_i32_0 = arith.constant 0 : i32
    %c0_i32_1 = arith.constant 0 : i32
    return %c0_i32, %c0_i32_0 : i32, i32
  }
  func.func @transform_2(%arg0: i32) -> (i32, i32) {
    %c0_i32 = arith.constant 0 : i32
    %c0_i32_0 = arith.constant 0 : i32
    %c0_i32_1 = arith.constant 0 : i32
    return %c0_i32, %c0_i32_0 : i32, i32
  }
  func.func @transform_3(%arg0: i32) -> (i32, i32, i32, i32) {
    %c0_i32 = arith.constant 0 : i32
    %c0_i32_0 = arith.constant 0 : i32
    %c0_i32_1 = arith.constant 0 : i32
    %c0_i32_2 = arith.constant 0 : i32
    return %arg0, %c0_i32, %c0_i32_0, %c0_i32_1 : i32, i32, i32, i32
  }
}

</mosaic_0001>

<llo_original>
// kernel: down_block.5
$region0: #{down_block.5}
  #allocation0 [shape = 'u32[]', space=smem, size = 0x4, offset = 0x4, fixed_abs, tag = 'smem constant byte address 0x4 - core index']
  #allocation1 [shape = 'u32[144,128]{1,0:T(1,128)}', space=vmem, size = 0x12000, scoped, tag = 'internal scratch']
  %s0 = inlined_call_operand.vmem [shape: bf16[2,8,8,128], index: 0, kind: input, shape index: {}]
  %s1 = inlined_call_operand.vmem [shape: f32[1,128], index: 1, kind: input, shape index: {}]
  %s2 = inlined_call_operand.vmem [shape: f32[1,128], index: 2, kind: input, shape index: {}]
  %s3 = inlined_call_operand.vmem [shape: f32[2,8,8,128], index: 3, kind: output, shape index: {}]
  %s4 = sld [smem:[#allocation0]]
  $region45: #{down_block.5} parent=0
    _
  %s6 = ssub.s32 1, %s4
  %s7 = scalar_select 0, %s6, %s4
  loop: start=0, step=1, limit=4
  $region2: #{down_block.5} parent=0 // loop_pre_header
    _
  $region3: #{down_block.5} parent=0 // loop_header
    %s9 = sphi 0, %s13
    %p10 = scmp.ge.s32.totalorder %s9, 4
    %s19 = sphi 0, %s21
    %s22 = sphi 0, %s19
    %s23 = sphi 0, %s22
    %s39 = sphi 0, %s23
    %s43 = sphi 0, %s43
    %s45 = sphi 0, %s43
    %s46 = sphi 0, %s45
    %s60 = sphi 0, %s46
    %s64 = sphi 0, %s64
    %s66 = sphi 0, %s64
    %s67 = sphi 0, %s66
    %s81 = sphi 0, %s67
    %s87 = sphi 0, %s89
    %s90 = sphi 0, %s87
    %s91 = sphi 0, %s90
    %s107 = sphi 0, %s91
  $region4: #{down_block.5} parent=0 // loop_header_branch
    %12 = sbr.rel (%p10) target = $region8
  $region5: #{down_block.5} parent=0 // loop_body
    %s14 = ssub.s32 %s9, 1
    %s15 = ssub.s32 %s9, 2
    %s16 = sadd.s32 %s9, 1
    %s17 = ssub.s32 %s9, %s16
    %p18 = scmp.eq.s32.totalorder %s17, 0
    %s20 = sadd.s32 %s19, 1
    %s21 = scalar_select %p18, %s19, %s20
    %p24 = pneg %p18
    %p25 = scmp.eq.s32.totalorder %s9, 1
    %p26 = por %p24, %p25
    %p27 = scmp.ne.s32.totalorder %s19, %s22
    %p28 = scmp.eq.s32.totalorder %s9, 0
    %p29 = por %p27, %p28
    %p30 = scmp.ne.s32.totalorder %s19, %s22
    %p31 = scmp.eq.s32.totalorder %s14, 1
    %p32 = por %p30, %p31
    %p33 = scmp.ne.s32.totalorder %s22, %s23
    %p34 = scmp.eq.s32.totalorder %s14, 0
    %p35 = por %p33, %p34
    %p36 = scmp.ne.s32.totalorder %s22, %s23
    %p37 = scmp.eq.s32.totalorder %s15, 1
    %p38 = por %p36, %p37
    %p40 = scmp.ne.s32.totalorder %s23, %s39
    %p41 = scmp.eq.s32.totalorder %s15, 0
    %p42 = por %p40, %p41
    %s44 = sadd.s32 %s43, 1
    %p47 = scmp.eq.s32.totalorder %s9, 1
    %p48 = scmp.ne.s32.totalorder %s43, %s45
    %p49 = scmp.eq.s32.totalorder %s9, 0
    %p50 = por %p48, %p49
    %p51 = scmp.ne.s32.totalorder %s43, %s45
    %p52 = scmp.eq.s32.totalorder %s14, 1
    %p53 = por %p51, %p52
    %p54 = scmp.ne.s32.totalorder %s45, %s46
    %p55 = scmp.eq.s32.totalorder %s14, 0
    %p56 = por %p54, %p55
    %p57 = scmp.ne.s32.totalorder %s45, %s46
    %p58 = scmp.eq.s32.totalorder %s15, 1
    %p59 = por %p57, %p58
    %p61 = scmp.ne.s32.totalorder %s46, %s60
    %p62 = scmp.eq.s32.totalorder %s15, 0
    %p63 = por %p61, %p62
    %s65 = sadd.s32 %s64, 1
    %p68 = scmp.eq.s32.totalorder %s9, 1
    %p69 = scmp.ne.s32.totalorder %s64, %s66
    %p70 = scmp.eq.s32.totalorder %s9, 0
    %p71 = por %p69, %p70
    %p72 = scmp.ne.s32.totalorder %s64, %s66
    %p73 = scmp.eq.s32.totalorder %s14, 1
    %p74 = por %p72, %p73
    %p75 = scmp.ne.s32.totalorder %s66, %s67
    %p76 = scmp.eq.s32.totalorder %s14, 0
    %p77 = por %p75, %p76
    %p78 = scmp.ne.s32.totalorder %s66, %s67
    %p79 = scmp.eq.s32.totalorder %s15, 1
    %p80 = por %p78, %p79
    %p82 = scmp.ne.s32.totalorder %s67, %s81
    %p83 = scmp.eq.s32.totalorder %s15, 0
    %p84 = por %p82, %p83
    %s85 = ssub.s32 %s9, %s16
    %p86 = scmp.eq.s32.totalorder %s85, 0
    %s88 = sadd.s32 %s87, 1
    %s89 = scalar_select %p86, %s87, %s88
    %p92 = pneg %p86
    %p93 = scmp.eq.s32.totalorder %s9, 1
    %p94 = por %p92, %p93
    %p95 = scmp.ne.s32.totalorder %s87, %s90
    %p96 = scmp.eq.s32.totalorder %s9, 0
    %p97 = por %p95, %p96
    %p98 = scmp.ne.s32.totalorder %s87, %s90
    %p99 = scmp.eq.s32.totalorder %s14, 1
    %p100 = por %p98, %p99
    %p101 = scmp.ne.s32.totalorder %s90, %s91
    %p102 = scmp.eq.s32.totalorder %s14, 0
    %p103 = por %p101, %p102
    %p104 = scmp.ne.s32.totalorder %s90, %s91
    %p105 = scmp.eq.s32.totalorder %s15, 1
    %p106 = por %p104, %p105
    %p108 = scmp.ne.s32.totalorder %s91, %s107
    %p109 = scmp.eq.s32.totalorder %s15, 0
    %p110 = por %p108, %p109
    %p111 = scmp.le.s32.totalorder 1, %s9
    %p112 = scmp.lt.s32.totalorder %s9, 3
    %p113 = pnand %p111, %p112
    %p114 = pneg %p113
    // Predicated region
    $region9: #{down_block.5} parent=5 // pred_check
      _
    $region10: #{down_block.5} parent=5 // pred_check_branch
      %116 = sbr.rel (%p113) target = $region12
    $region11: #{down_block.5} parent=5 // pred_region
      %s117 = ssub.s32 %s9, 1
      // Predicated region
      $region13: #{down_block.5} parent=11 // pred_check
        %p118 = pneg %p56
      $region14: #{down_block.5} parent=11 // pred_check_branch
        %120 = sbr.rel (%p118) target = $region16
      $region15: #{down_block.5} parent=11 // pred_region
        _
      $region16: #{down_block.5} parent=11 // pred_fallthru
        _
      // Predicated region
      $region17: #{down_block.5} parent=11 // pred_check
        %p121 = pneg %p77
      $region18: #{down_block.5} parent=11 // pred_check_branch
        %123 = sbr.rel (%p121) target = $region20
      $region19: #{down_block.5} parent=11 // pred_region
        _
      $region20: #{down_block.5} parent=11 // pred_fallthru
        _
    $region12: #{down_block.5} parent=5 // pred_fallthru
      _
    %p124 = scmp.lt.s32.totalorder %s9, 2
    // Predicated region
    $region21: #{down_block.5} parent=5 // pred_check
      %p125 = pneg %p124
    $region22: #{down_block.5} parent=5 // pred_check_branch
      %127 = sbr.rel (%p125) target = $region24
    $region23: #{down_block.5} parent=5 // pred_region
      // Predicated region
      $region25: #{down_block.5} parent=23 // pred_check
        %p128 = pneg %p29
      $region26: #{down_block.5} parent=23 // pred_check_branch
        %130 = sbr.rel (%p128) target = $region28
      $region27: #{down_block.5} parent=23 // pred_region
        %p131 = scmp.lt.s32.totalorder %s9, 1
        %s132 = scalar_select %p131, %s9, 1
        %s133 = smul.addr %s132, 8
        %s134 = smul.addr %s133, 4
        %s135 = scalar_lea.vmem %s0, %s134
      $region28: #{down_block.5} parent=23 // pred_fallthru
        _
    $region24: #{down_block.5} parent=5 // pred_fallthru
      _
    %p136 = scmp.le.s32.totalorder 1, %s9
    %p137 = scmp.lt.s32.totalorder %s9, 3
    %p138 = pnand %p136, %p137
    %p139 = pneg %p138
    // Predicated region
    $region29: #{down_block.5} parent=5 // pred_check
      _
    $region30: #{down_block.5} parent=5 // pred_check_branch
      %141 = sbr.rel (%p138) target = $region32
    $region31: #{down_block.5} parent=5 // pred_region
      %s142 = ssub.s32 %s9, 1
      %p143 = scmp.lt.s32.totalorder %s14, 1
      %s144 = scalar_select %p143, %s14, 1
      %s145 = smul.addr %s144, 8
      %s146 = smul.addr %s145, 4
      %s147 = scalar_lea.vmem %s0, %s146
      %p148 = pneg %p35
      %p149 = pneg %p32
      %p150 = pneg %p56
      %p151 = pneg %p53
      %p152 = pneg %p77
      %p153 = pneg %p74
      %p154 = pneg %p103
      %p155 = pneg %p100
      %p156 = scmp.lt.s32.totalorder %s14, 1
      %s157 = scalar_select %p156, %s14, 1
      %s158 = smul.addr %s157, 8
      %s159 = smul.addr %s158, 8
      %s160 = scalar_lea.vmem %s3, %s159
      %p161 = scmp.lt.s32.totalorder %s14, 1
      %s162 = scalar_select %p161, %s14, 1
      %s163 = smul.addr %s162, 8
      %s164 = smul.addr %s163, 4
      %s165 = scalar_lea.vmem %s0, %s164
      %p166 = scmp.lt.s32.totalorder %s14, 1
      %s167 = scalar_select %p166, %s14, 1
      %s168 = smul.addr %s167, 8
      %s169 = smul.addr %s168, 8
      %s170 = scalar_lea.vmem %s3, %s169
      %v171 = vld [vmem:[%s165] sm:$0xf]
      %v172 = vld [vmem:[%s165 + $0x4] sm:$0xf]
      %v173 = vld [vmem:[%s165 + $0x8] sm:$0xf]
      %v174 = vld [vmem:[%s165 + $0xc] sm:$0xf]
      %v175 = vld [vmem:[%s165 + $0x10] sm:$0xf]
      %v176 = vld [vmem:[%s165 + $0x14] sm:$0xf]
      %v177 = vld [vmem:[%s165 + $0x18] sm:$0xf]
      %v178 = vld [vmem:[%s165 + $0x1c] sm:$0xf]
      %v179 = vunpack.c.l.bf16 %v171
      %v180 = vunpack.c.l.bf16 %v172
      %v181 = vunpack.c.l.bf16 %v173
      %v182 = vunpack.c.l.bf16 %v174
      %v183 = vunpack.c.l.bf16 %v175
      %v184 = vunpack.c.l.bf16 %v176
      %v185 = vunpack.c.l.bf16 %v177
      %v186 = vunpack.c.l.bf16 %v178
      %v187 = vld [vmem:[%s1] sm:$0x1]
      %v189 = vlaneseq
      %v190 = vshrl.u32 %v189, 7
      %v191 = vsub.s32 0, %v190
      %v192 = vrot.slane %v187, %v191
      %v194 = vmul.f32 %v179, %v192
      %v195 = vmul.f32 %v180, %v192
      %v196 = vmul.f32 %v181, %v192
      %v197 = vmul.f32 %v182, %v192
      %v198 = vmul.f32 %v183, %v192
      %v199 = vmul.f32 %v184, %v192
      %v200 = vmul.f32 %v185, %v192
      %v201 = vmul.f32 %v186, %v192
      %v202 = vld [vmem:[%s2] sm:$0x1]
      %v204 = vlaneseq
      %v205 = vshrl.u32 %v204, 7
      %v206 = vsub.s32 0, %v205
      %v207 = vrot.slane %v202, %v206
      %v209 = vadd.f32 %v194, %v207
      %v210 = vadd.f32 %v195, %v207
      %v211 = vadd.f32 %v196, %v207
      %v212 = vadd.f32 %v197, %v207
      %v213 = vadd.f32 %v198, %v207
      %v214 = vadd.f32 %v199, %v207
      %v215 = vadd.f32 %v200, %v207
      %v216 = vadd.f32 %v201, %v207
      %v217 = vmax.f32 %v209, 0.0
      %v218 = vmax.f32 %v210, 0.0
      %v219 = vmax.f32 %v211, 0.0
      %v220 = vmax.f32 %v212, 0.0
      %v221 = vmax.f32 %v213, 0.0
      %v222 = vmax.f32 %v214, 0.0
      %v223 = vmax.f32 %v215, 0.0
      %v224 = vmax.f32 %v216, 0.0
      %225 = vst [vmem:[%s170] sm:$0xff] %v217
      %226 = vst [vmem:[%s170 + $0x8] sm:$0xff] %v218
      %227 = vst [vmem:[%s170 + $0x10] sm:$0xff] %v219
      %228 = vst [vmem:[%s170 + $0x18] sm:$0xff] %v220
      %229 = vst [vmem:[%s170 + $0x20] sm:$0xff] %v221
      %230 = vst [vmem:[%s170 + $0x28] sm:$0xff] %v222
      %231 = vst [vmem:[%s170 + $0x30] sm:$0xff] %v223
      %232 = vst [vmem:[%s170 + $0x38] sm:$0xff] %v224
      %p233 = scmp.lt.s32.totalorder %s14, 1
      %s234 = scalar_select %p233, %s14, 1
      %s235 = smul.addr %s234, 8
      %s236 = smul.addr %s235, 8
      %s237 = scalar_lea.vmem %s3, %s236
      // Predicated region
      $region33: #{down_block.5} parent=31 // pred_check
        %p238 = pneg %p100
      $region34: #{down_block.5} parent=31 // pred_check_branch
        %240 = sbr.rel (%p238) target = $region36
      $region35: #{down_block.5} parent=31 // pred_region
        _
      $region36: #{down_block.5} parent=31 // pred_fallthru
        _
    $region32: #{down_block.5} parent=5 // pred_fallthru
      _
    %p241 = scmp.le.s32.totalorder 2, %s9
    // Predicated region
    $region37: #{down_block.5} parent=5 // pred_check
      %p242 = pneg %p241
    $region38: #{down_block.5} parent=5 // pred_check_branch
      %244 = sbr.rel (%p242) target = $region40
    $region39: #{down_block.5} parent=5 // pred_region
      %s245 = ssub.s32 %s9, 2
      // Predicated region
      $region41: #{down_block.5} parent=39 // pred_check
        %p246 = pneg %p106
      $region42: #{down_block.5} parent=39 // pred_check_branch
        %248 = sbr.rel (%p246) target = $region44
      $region43: #{down_block.5} parent=39 // pred_region
        %p249 = scmp.lt.s32.totalorder %s15, 1
        %s250 = scalar_select %p249, %s15, 1
        %s251 = smul.addr %s250, 8
        %s252 = smul.addr %s251, 8
        %s253 = scalar_lea.vmem %s3, %s252
      $region44: #{down_block.5} parent=39 // pred_fallthru
        _
    $region40: #{down_block.5} parent=5 // pred_fallthru
      _
  $region6: #{down_block.5} parent=0 // loop_footer
    %s13 = sadd.s32 1, %s9
  $region7: #{down_block.5} parent=0 // loop_footer_branch
    %8 = sbr.rel target = $region3
  $region8: #{down_block.5} parent=0 // loop_exit
    _

// kernel: down_block.3
$region0: #{down_block.3}
  #allocation0 [shape = 'u32[]', space=smem, size = 0x4, offset = 0x4, fixed_abs, tag = 'smem constant byte address 0x4 - core index']
  #allocation1 [shape = 'u32[144,128]{1,0:T(1,128)}', space=vmem, size = 0x12000, scoped, tag = 'internal scratch']
  %s0 = inlined_call_operand.vmem [shape: f32[2,16,8,8], index: 0, kind: input, shape index: {}]
  %s1 = inlined_call_operand.vmem [shape: f32[1,4], index: 1, kind: input, shape index: {}]
  %s2 = inlined_call_operand.vmem [shape: f32[1,4], index: 2, kind: input, shape index: {}]
  %s3 = inlined_call_operand.vmem [shape: bf16[36,128], index: 3, kind: input, shape index: {}]
  %s4 = inlined_call_operand.vmem [shape: bf16[2,8,8,128], index: 4, kind: output, shape index: {0}]
  %s5 = inlined_call_operand.vmem [shape: f32[2,2,128], index: 5, kind: output, shape index: {1}]
  %6 = xla_tuple %s4, %s5
  %s7 = sld [smem:[#allocation0]]
  $region57: #{down_block.3} parent=0
    _
  %s9 = ssub.s32 1, %s7
  %s10 = scalar_select 0, %s9, %s7
  loop: start=0, step=1, limit=4
  $region2: #{down_block.3} parent=0 // loop_pre_header
    _
  $region3: #{down_block.3} parent=0 // loop_header
    %s12 = sphi 0, %s16
    %p13 = scmp.ge.s32.totalorder %s12, 4
    %s22 = sphi 0, %s24
    %s25 = sphi 0, %s22
    %s26 = sphi 0, %s25
    %s42 = sphi 0, %s26
    %s46 = sphi 0, %s46
    %s48 = sphi 0, %s46
    %s49 = sphi 0, %s48
    %s63 = sphi 0, %s49
    %s67 = sphi 0, %s67
    %s69 = sphi 0, %s67
    %s70 = sphi 0, %s69
    %s84 = sphi 0, %s70
    %s88 = sphi 0, %s88
    %s90 = sphi 0, %s88
    %s91 = sphi 0, %s90
    %s105 = sphi 0, %s91
    %s111 = sphi 0, %s113
    %s114 = sphi 0, %s111
    %s115 = sphi 0, %s114
    %s131 = sphi 0, %s115
    %s137 = sphi 0, %s139
    %s140 = sphi 0, %s137
    %s141 = sphi 0, %s140
    %s157 = sphi 0, %s141
  $region4: #{down_block.3} parent=0 // loop_header_branch
    %15 = sbr.rel (%p13) target = $region8
  $region5: #{down_block.3} parent=0 // loop_body
    %s17 = ssub.s32 %s12, 1
    %s18 = ssub.s32 %s12, 2
    %s19 = sadd.s32 %s12, 1
    %s20 = ssub.s32 %s12, %s19
    %p21 = scmp.eq.s32.totalorder %s20, 0
    %s23 = sadd.s32 %s22, 1
    %s24 = scalar_select %p21, %s22, %s23
    %p27 = pneg %p21
    %p28 = scmp.eq.s32.totalorder %s12, 1
    %p29 = por %p27, %p28
    %p30 = scmp.ne.s32.totalorder %s22, %s25
    %p31 = scmp.eq.s32.totalorder %s12, 0
    %p32 = por %p30, %p31
    %p33 = scmp.ne.s32.totalorder %s22, %s25
    %p34 = scmp.eq.s32.totalorder %s17, 1
    %p35 = por %p33, %p34
    %p36 = scmp.ne.s32.totalorder %s25, %s26
    %p37 = scmp.eq.s32.totalorder %s17, 0
    %p38 = por %p36, %p37
    %p39 = scmp.ne.s32.totalorder %s25, %s26
    %p40 = scmp.eq.s32.totalorder %s18, 1
    %p41 = por %p39, %p40
    %p43 = scmp.ne.s32.totalorder %s26, %s42
    %p44 = scmp.eq.s32.totalorder %s18, 0
    %p45 = por %p43, %p44
    %s47 = sadd.s32 %s46, 1
    %p50 = scmp.eq.s32.totalorder %s12, 1
    %p51 = scmp.ne.s32.totalorder %s46, %s48
    %p52 = scmp.eq.s32.totalorder %s12, 0
    %p53 = por %p51, %p52
    %p54 = scmp.ne.s32.totalorder %s46, %s48
    %p55 = scmp.eq.s32.totalorder %s17, 1
    %p56 = por %p54, %p55
    %p57 = scmp.ne.s32.totalorder %s48, %s49
    %p58 = scmp.eq.s32.totalorder %s17, 0
    %p59 = por %p57, %p58
    %p60 = scmp.ne.s32.totalorder %s48, %s49
    %p61 = scmp.eq.s32.totalorder %s18, 1
    %p62 = por %p60, %p61
    %p64 = scmp.ne.s32.totalorder %s49, %s63
    %p65 = scmp.eq.s32.totalorder %s18, 0
    %p66 = por %p64, %p65
    %s68 = sadd.s32 %s67, 1
    %p71 = scmp.eq.s32.totalorder %s12, 1
    %p72 = scmp.ne.s32.totalorder %s67, %s69
    %p73 = scmp.eq.s32.totalorder %s12, 0
    %p74 = por %p72, %p73
    %p75 = scmp.ne.s32.totalorder %s67, %s69
    %p76 = scmp.eq.s32.totalorder %s17, 1
    %p77 = por %p75, %p76
    %p78 = scmp.ne.s32.totalorder %s69, %s70
    %p79 = scmp.eq.s32.totalorder %s17, 0
    %p80 = por %p78, %p79
    %p81 = scmp.ne.s32.totalorder %s69, %s70
    %p82 = scmp.eq.s32.totalorder %s18, 1
    %p83 = por %p81, %p82
    %p85 = scmp.ne.s32.totalorder %s70, %s84
    %p86 = scmp.eq.s32.totalorder %s18, 0
    %p87 = por %p85, %p86
    %s89 = sadd.s32 %s88, 1
    %p92 = scmp.eq.s32.totalorder %s12, 1
    %p93 = scmp.ne.s32.totalorder %s88, %s90
    %p94 = scmp.eq.s32.totalorder %s12, 0
    %p95 = por %p93, %p94
    %p96 = scmp.ne.s32.totalorder %s88, %s90
    %p97 = scmp.eq.s32.totalorder %s17, 1
    %p98 = por %p96, %p97
    %p99 = scmp.ne.s32.totalorder %s90, %s91
    %p100 = scmp.eq.s32.totalorder %s17, 0
    %p101 = por %p99, %p100
    %p102 = scmp.ne.s32.totalorder %s90, %s91
    %p103 = scmp.eq.s32.totalorder %s18, 1
    %p104 = por %p102, %p103
    %p106 = scmp.ne.s32.totalorder %s91, %s105
    %p107 = scmp.eq.s32.totalorder %s18, 0
    %p108 = por %p106, %p107
    %s109 = ssub.s32 %s12, %s19
    %p110 = scmp.eq.s32.totalorder %s109, 0
    %s112 = sadd.s32 %s111, 1
    %s113 = scalar_select %p110, %s111, %s112
    %p116 = pneg %p110
    %p117 = scmp.eq.s32.totalorder %s12, 1
    %p118 = por %p116, %p117
    %p119 = scmp.ne.s32.totalorder %s111, %s114
    %p120 = scmp.eq.s32.totalorder %s12, 0
    %p121 = por %p119, %p120
    %p122 = scmp.ne.s32.totalorder %s111, %s114
    %p123 = scmp.eq.s32.totalorder %s17, 1
    %p124 = por %p122, %p123
    %p125 = scmp.ne.s32.totalorder %s114, %s115
    %p126 = scmp.eq.s32.totalorder %s17, 0
    %p127 = por %p125, %p126
    %p128 = scmp.ne.s32.totalorder %s114, %s115
    %p129 = scmp.eq.s32.totalorder %s18, 1
    %p130 = por %p128, %p129
    %p132 = scmp.ne.s32.totalorder %s115, %s131
    %p133 = scmp.eq.s32.totalorder %s18, 0
    %p134 = por %p132, %p133
    %s135 = ssub.s32 %s12, %s19
    %p136 = scmp.eq.s32.totalorder %s135, 0
    %s138 = sadd.s32 %s137, 1
    %s139 = scalar_select %p136, %s137, %s138
    %p142 = pneg %p136
    %p143 = scmp.eq.s32.totalorder %s12, 1
    %p144 = por %p142, %p143
    %p145 = scmp.ne.s32.totalorder %s137, %s140
    %p146 = scmp.eq.s32.totalorder %s12, 0
    %p147 = por %p145, %p146
    %p148 = scmp.ne.s32.totalorder %s137, %s140
    %p149 = scmp.eq.s32.totalorder %s17, 1
    %p150 = por %p148, %p149
    %p151 = scmp.ne.s32.totalorder %s140, %s141
    %p152 = scmp.eq.s32.totalorder %s17, 0
    %p153 = por %p151, %p152
    %p154 = scmp.ne.s32.totalorder %s140, %s141
    %p155 = scmp.eq.s32.totalorder %s18, 1
    %p156 = por %p154, %p155
    %p158 = scmp.ne.s32.totalorder %s141, %s157
    %p159 = scmp.eq.s32.totalorder %s18, 0
    %p160 = por %p158, %p159
    %p161 = scmp.le.s32.totalorder 1, %s12
    %p162 = scmp.lt.s32.totalorder %s12, 3
    %p163 = pnand %p161, %p162
    %p164 = pneg %p163
    // Predicated region
    $region9: #{down_block.3} parent=5 // pred_check
      _
    $region10: #{down_block.3} parent=5 // pred_check_branch
      %166 = sbr.rel (%p163) target = $region12
    $region11: #{down_block.3} parent=5 // pred_region
      %s167 = ssub.s32 %s12, 1
      // Predicated region
      $region13: #{down_block.3} parent=11 // pred_check
        %p168 = pneg %p59
      $region14: #{down_block.3} parent=11 // pred_check_branch
        %170 = sbr.rel (%p168) target = $region16
      $region15: #{down_block.3} parent=11 // pred_region
        _
      $region16: #{down_block.3} parent=11 // pred_fallthru
        _
      // Predicated region
      $region17: #{down_block.3} parent=11 // pred_check
        %p171 = pneg %p80
      $region18: #{down_block.3} parent=11 // pred_check_branch
        %173 = sbr.rel (%p171) target = $region20
      $region19: #{down_block.3} parent=11 // pred_region
        _
      $region20: #{down_block.3} parent=11 // pred_fallthru
        _
      // Predicated region
      $region21: #{down_block.3} parent=11 // pred_check
        %p174 = pneg %p101
      $region22: #{down_block.3} parent=11 // pred_check_branch
        %176 = sbr.rel (%p174) target = $region24
      $region23: #{down_block.3} parent=11 // pred_region
        _
      $region24: #{down_block.3} parent=11 // pred_fallthru
        _
    $region12: #{down_block.3} parent=5 // pred_fallthru
      _
    %p177 = scmp.lt.s32.totalorder %s12, 2
    // Predicated region
    $region25: #{down_block.3} parent=5 // pred_check
      %p178 = pneg %p177
    $region26: #{down_block.3} parent=5 // pred_check_branch
      %180 = sbr.rel (%p178) target = $region28
    $region27: #{down_block.3} parent=5 // pred_region
      // Predicated region
      $region29: #{down_block.3} parent=27 // pred_check
        %p181 = pneg %p32
      $region30: #{down_block.3} parent=27 // pred_check_branch
        %183 = sbr.rel (%p181) target = $region32
      $region31: #{down_block.3} parent=27 // pred_region
        %p184 = scmp.lt.s32.totalorder %s12, 1
        %s185 = scalar_select %p184, %s12, 1
        %s186 = smul.addr %s185, 16
        %s187 = smul.addr %s186, 8
        %s188 = scalar_lea.vmem %s0, %s187
      $region32: #{down_block.3} parent=27 // pred_fallthru
        _
    $region28: #{down_block.3} parent=5 // pred_fallthru
      _
    %p189 = scmp.le.s32.totalorder 1, %s12
    %p190 = scmp.lt.s32.totalorder %s12, 3
    %p191 = pnand %p189, %p190
    %p192 = pneg %p191
    // Predicated region
    $region33: #{down_block.3} parent=5 // pred_check
      _
    $region34: #{down_block.3} parent=5 // pred_check_branch
      %194 = sbr.rel (%p191) target = $region36
    $region35: #{down_block.3} parent=5 // pred_region
      %s195 = ssub.s32 %s12, 1
      %p196 = scmp.lt.s32.totalorder %s17, 1
      %s197 = scalar_select %p196, %s17, 1
      %s198 = smul.addr %s197, 16
      %s199 = smul.addr %s198, 8
      %s200 = scalar_lea.vmem %s0, %s199
      %p201 = pneg %p38
      %p202 = pneg %p35
      %p203 = pneg %p59
      %p204 = pneg %p56
      %p205 = pneg %p80
      %p206 = pneg %p77
      %p207 = pneg %p101
      %p208 = pneg %p98
      %p209 = pneg %p127
      %p210 = pneg %p124
      %p211 = scmp.lt.s32.totalorder %s17, 1
      %s212 = scalar_select %p211, %s17, 1
      %s213 = smul.addr %s212, 8
      %s214 = smul.addr %s213, 4
      %s215 = scalar_lea.vmem %s4, %s214
      %p216 = pneg %p153
      %p217 = pneg %p150
      %p218 = scmp.lt.s32.totalorder %s17, 1
      %s219 = scalar_select %p218, %s17, 1
      %s220 = smul.addr %s219, 2
      %s221 = scalar_lea.vmem %s5, %s220
      %p222 = scmp.lt.s32.totalorder %s17, 1
      %s223 = scalar_select %p222, %s17, 1
      %s224 = smul.addr %s223, 16
      %s225 = smul.addr %s224, 8
      %s226 = scalar_lea.vmem %s0, %s225
      %p227 = scmp.lt.s32.totalorder %s17, 1
      %s228 = scalar_select %p227, %s17, 1
      %s229 = smul.addr %s228, 8
      %s230 = smul.addr %s229, 4
      %s231 = scalar_lea.vmem %s4, %s230
      %p232 = scmp.lt.s32.totalorder %s17, 1
      %s233 = scalar_select %p232, %s17, 1
      %s234 = smul.addr %s233, 2
      %s235 = scalar_lea.vmem %s5, %s234
      %v237 = vld [vmem:[%s226] sm:$0xff]
      %v238 = vld [vmem:[%s226 + $0x8] sm:$0xff]
      %v239 = vld [vmem:[%s226 + $0x10] sm:$0xff]
      %v240 = vld [vmem:[%s226 + $0x18] sm:$0xff]
      %v241 = vld [vmem:[%s226 + $0x20] sm:$0xff]
      %v242 = vld [vmem:[%s226 + $0x28] sm:$0xff]
      %v243 = vld [vmem:[%s226 + $0x30] sm:$0xff]
      %v244 = vld [vmem:[%s226 + $0x38] sm:$0xff]
      %v245 = vld [vmem:[%s226 + $0x40] sm:$0xff]
      %v246 = vld [vmem:[%s226 + $0x48] sm:$0xff]
      %v247 = vld [vmem:[%s226 + $0x50] sm:$0xff]
      %v248 = vld [vmem:[%s226 + $0x58] sm:$0xff]
      %v249 = vld [vmem:[%s226 + $0x60] sm:$0xff]
      %v250 = vld [vmem:[%s226 + $0x68] sm:$0xff]
      %v251 = vld [vmem:[%s226 + $0x70] sm:$0xff]
      %v252 = vld [vmem:[%s226 + $0x78] sm:$0xff]
      %269 = vrot.lane.b32.xlu0 %v237, 124
      %v270 = vpop.permute.xlu0 %269
      %271 = vrot.lane.b32.xlu0 %v238, 124
      %v272 = vpop.permute.xlu0 %271
      %273 = vrot.lane.b32.xlu0 %v239, 124
      %v274 = vpop.permute.xlu0 %273
      %275 = vrot.lane.b32.xlu0 %v240, 124
      %v276 = vpop.permute.xlu0 %275
      %277 = vrot.lane.b32.xlu0 %v241, 124
      %v278 = vpop.permute.xlu0 %277
      %279 = vrot.lane.b32.xlu0 %v242, 124
      %v280 = vpop.permute.xlu0 %279
      %281 = vrot.lane.b32.xlu0 %v243, 124
      %v282 = vpop.permute.xlu0 %281
      %283 = vrot.lane.b32.xlu0 %v244, 124
      %v284 = vpop.permute.xlu0 %283
      %285 = vrot.lane.b32.xlu0 %v245, 124
      %v286 = vpop.permute.xlu0 %285
      %287 = vrot.lane.b32.xlu0 %v246, 124
      %v288 = vpop.permute.xlu0 %287
      %289 = vrot.lane.b32.xlu0 %v247, 124
      %v290 = vpop.permute.xlu0 %289
      %291 = vrot.lane.b32.xlu0 %v248, 124
      %v292 = vpop.permute.xlu0 %291
      %293 = vrot.lane.b32.xlu0 %v249, 124
      %v294 = vpop.permute.xlu0 %293
      %295 = vrot.lane.b32.xlu0 %v250, 124
      %v296 = vpop.permute.xlu0 %295
      %297 = vrot.lane.b32.xlu0 %v251, 124
      %v298 = vpop.permute.xlu0 %297
      %299 = vrot.lane.b32.xlu0 %v252, 124
      %v300 = vpop.permute.xlu0 %299
      %v317 = vmax.f32 %v237, %v270
      %v318 = vmax.f32 %v238, %v272
      %v319 = vmax.f32 %v239, %v274
      %v320 = vmax.f32 %v240, %v276
      %v321 = vmax.f32 %v241, %v278
      %v322 = vmax.f32 %v242, %v280
      %v323 = vmax.f32 %v243, %v282
      %v324 = vmax.f32 %v244, %v284
      %v325 = vmax.f32 %v245, %v286
      %v326 = vmax.f32 %v246, %v288
      %v327 = vmax.f32 %v247, %v290
      %v328 = vmax.f32 %v248, %v292
      %v329 = vmax.f32 %v249, %v294
      %v330 = vmax.f32 %v250, %v296
      %v331 = vmax.f32 %v251, %v298
      %v332 = vmax.f32 %v252, %v300
      %v333 = vmax.f32 %v317, %v318
      %v334 = vmax.f32 %v319, %v320
      %v335 = vmax.f32 %v321, %v322
      %v336 = vmax.f32 %v323, %v324
      %v337 = vmax.f32 %v325, %v326
      %v338 = vmax.f32 %v327, %v328
      %v339 = vmax.f32 %v329, %v330
      %v340 = vmax.f32 %v331, %v332
      %v341 = vld [vmem:[%s1] sm:$0x1]
      %v343 = vlaneseq
      %v344 = vshrl.u32 %v343, 7
      %v345 = vsub.s32 0, %v344
      %v346 = vrot.slane %v341, %v345
      %v348 = vmul.f32 %v333, %v346
      %v349 = vmul.f32 %v334, %v346
      %v350 = vmul.f32 %v335, %v346
      %v351 = vmul.f32 %v336, %v346
      %v352 = vmul.f32 %v337, %v346
      %v353 = vmul.f32 %v338, %v346
      %v354 = vmul.f32 %v339, %v346
      %v355 = vmul.f32 %v340, %v346
      %v356 = vld [vmem:[%s2] sm:$0x1]
      %v358 = vlaneseq
      %v359 = vshrl.u32 %v358, 7
      %v360 = vsub.s32 0, %v359
      %v361 = vrot.slane %v356, %v360
      %v363 = vadd.f32 %v348, %v361
      %v364 = vadd.f32 %v349, %v361
      %v365 = vadd.f32 %v350, %v361
      %v366 = vadd.f32 %v351, %v361
      %v367 = vadd.f32 %v352, %v361
      %v368 = vadd.f32 %v353, %v361
      %v369 = vadd.f32 %v354, %v361
      %v370 = vadd.f32 %v355, %v361
      %v371 = vpack.c.bf16 %v363, %v363
      %v372 = vpack.c.bf16 %v364, %v364
      %v373 = vpack.c.bf16 %v365, %v365
      %v374 = vpack.c.bf16 %v366, %v366
      %v375 = vpack.c.bf16 %v367, %v367
      %v376 = vpack.c.bf16 %v368, %v368
      %v377 = vpack.c.bf16 %v369, %v369
      %v378 = vpack.c.bf16 %v370, %v370
      %v380 = vshrl.u32 0, 16
      %v382 = vrot.slane %v380, 7
      %v383 = vshll.u32 0, 16
      %v385 = vor.u32 %v382, %v383
      %v387 = vshrl.u32 %v371, 16
      %v389 = vrot.slane %v387, 7
      %v390 = vshll.u32 %v371, 16
      %v392 = vor.u32 %v389, %v390
      %v394 = vshrl.u32 %v372, 16
      %v396 = vrot.slane %v394, 7
      %v397 = vshll.u32 %v372, 16
      %v399 = vor.u32 %v396, %v397
      %v401 = vshrl.u32 %v373, 16
      %v403 = vrot.slane %v401, 7
      %v404 = vshll.u32 %v373, 16
      %v406 = vor.u32 %v403, %v404
      %v408 = vshrl.u32 %v374, 16
      %v410 = vrot.slane %v408, 7
      %v411 = vshll.u32 %v374, 16
      %v413 = vor.u32 %v410, %v411
      %v415 = vshrl.u32 %v375, 16
      %v417 = vrot.slane %v415, 7
      %v418 = vshll.u32 %v375, 16
      %v420 = vor.u32 %v417, %v418
      %v422 = vshrl.u32 %v376, 16
      %v424 = vrot.slane %v422, 7
      %v425 = vshll.u32 %v376, 16
      %v427 = vor.u32 %v424, %v425
      %v429 = vshrl.u32 %v377, 16
      %v431 = vrot.slane %v429, 7
      %v432 = vshll.u32 %v377, 16
      %v434 = vor.u32 %v431, %v432
      %v436 = vshrl.u32 %v378, 16
      %v438 = vrot.slane %v436, 7
      %v439 = vshll.u32 %v378, 16
      %v441 = vor.u32 %v438, %v439
      %vm451 = vcmask 1040384
      %vm452 = vsmask.f32 256
      %vm453 = vmand %vm451, %vm452
      %v454 = vsel %vm453, 0, %v385
      %v455 = vsel %vm453, 0, %v392
      %v456 = vsel %vm453, 0, %v399
      %v457 = vsel %vm453, 0, %v406
      %v458 = vsel %vm453, 0, %v413
      %v459 = vsel %vm453, 0, %v420
      %v460 = vsel %vm453, 0, %v427
      %v461 = vsel %vm453, 0, %v434
      %v462 = vsel %vm453, 0, %v441
      %vm463 = vcmask 1044480
      %vm464 = vsmask.f32 4352
      %vm465 = vmand %vm463, %vm464
      %v466 = vsel %vm465, %v454, 0
      %v467 = vsel %vm465, %v455, 0
      %v468 = vsel %vm465, %v456, 0
      %v469 = vsel %vm465, %v457, 0
      %v470 = vsel %vm465, %v458, 0
      %v471 = vsel %vm465, %v459, 0
      %v472 = vsel %vm465, %v460, 0
      %v473 = vsel %vm465, %v461, 0
      %v474 = vsel %vm465, %v462, 0
      %v475 = vld [vmem:[%s3] sm:$0xf]
      %v476 = vld [vmem:[%s3 + $0x4] sm:$0xf]
      %v477 = vld [vmem:[%s3 + $0x8] sm:$0xf]
      %v478 = vld [vmem:[%s3 + $0xc] sm:$0xf]
      %v479 = vld [vmem:[%s3 + $0x10] sm:$0x3]
      %v481 = vshrl.u32 %v466, 16
      %v483 = vshll.u32 %v466, 16
      %v485 = vrot.slane %v483, 1
      %v486 = vor.u32 %v481, %v485
      %v488 = vshrl.u32 %v467, 16
      %v490 = vshll.u32 %v467, 16
      %v492 = vrot.slane %v490, 1
      %v493 = vor.u32 %v488, %v492
      %v495 = vshrl.u32 %v468, 16
      %v497 = vshll.u32 %v468, 16
      %v499 = vrot.slane %v497, 1
      %v500 = vor.u32 %v495, %v499
      %v502 = vshrl.u32 %v469, 16
      %v504 = vshll.u32 %v469, 16
      %v506 = vrot.slane %v504, 1
      %v507 = vor.u32 %v502, %v506
      %v509 = vshrl.u32 %v470, 16
      %v511 = vshll.u32 %v470, 16
      %v513 = vrot.slane %v511, 1
      %v514 = vor.u32 %v509, %v513
      %v516 = vshrl.u32 %v471, 16
      %v518 = vshll.u32 %v471, 16
      %v520 = vrot.slane %v518, 1
      %v521 = vor.u32 %v516, %v520
      %v523 = vshrl.u32 %v472, 16
      %v525 = vshll.u32 %v472, 16
      %v527 = vrot.slane %v525, 1
      %v528 = vor.u32 %v523, %v527
      %v530 = vshrl.u32 %v473, 16
      %v532 = vshll.u32 %v473, 16
      %v534 = vrot.slane %v532, 1
      %v535 = vor.u32 %v530, %v534
      %536 = vrot.lane.b32.xlu0 %v486, 4
      %v537 = vpop.permute.xlu0 %536
      %538 = vrot.lane.b32.xlu0 %v493, 4
      %v539 = vpop.permute.xlu0 %538
      %540 = vrot.lane.b32.xlu0 %v500, 4
      %v541 = vpop.permute.xlu0 %540
      %542 = vrot.lane.b32.xlu0 %v507, 4
      %v543 = vpop.permute.xlu0 %542
      %544 = vrot.lane.b32.xlu0 %v514, 4
      %v545 = vpop.permute.xlu0 %544
      %546 = vrot.lane.b32.xlu0 %v521, 4
      %v547 = vpop.permute.xlu0 %546
      %548 = vrot.lane.b32.xlu0 %v528, 4
      %v549 = vpop.permute.xlu0 %548
      %550 = vrot.lane.b32.xlu0 %v535, 4
      %v551 = vpop.permute.xlu0 %550
      %v560 = vrot.slane %v466, 1
      %v561 = vrot.slane %v467, 1
      %v562 = vrot.slane %v468, 1
      %v563 = vrot.slane %v469, 1
      %v564 = vrot.slane %v470, 1
      %v565 = vrot.slane %v471, 1
      %v566 = vrot.slane %v472, 1
      %v567 = vrot.slane %v473, 1
      %568 = vrot.lane.b32.xlu0 %v560, 8
      %v569 = vpop.permute.xlu0 %568
      %570 = vrot.lane.b32.xlu0 %v561, 8
      %v571 = vpop.permute.xlu0 %570
      %572 = vrot.lane.b32.xlu0 %v562, 8
      %v573 = vpop.permute.xlu0 %572
      %574 = vrot.lane.b32.xlu0 %v563, 8
      %v575 = vpop.permute.xlu0 %574
      %576 = vrot.lane.b32.xlu0 %v564, 8
      %v577 = vpop.permute.xlu0 %576
      %578 = vrot.lane.b32.xlu0 %v565, 8
      %v579 = vpop.permute.xlu0 %578
      %580 = vrot.lane.b32.xlu0 %v566, 8
      %v581 = vpop.permute.xlu0 %580
      %582 = vrot.lane.b32.xlu0 %v567, 8
      %v583 = vpop.permute.xlu0 %582
      %585 = vrot.lane.b32.xlu0 %v467, 12
      %v586 = vpop.permute.xlu0 %585
      %587 = vrot.lane.b32.xlu0 %v468, 12
      %v588 = vpop.permute.xlu0 %587
      %589 = vrot.lane.b32.xlu0 %v469, 12
      %v590 = vpop.permute.xlu0 %589
      %591 = vrot.lane.b32.xlu0 %v470, 12
      %v592 = vpop.permute.xlu0 %591
      %593 = vrot.lane.b32.xlu0 %v471, 12
      %v594 = vpop.permute.xlu0 %593
      %595 = vrot.lane.b32.xlu0 %v472, 12
      %v596 = vpop.permute.xlu0 %595
      %597 = vrot.lane.b32.xlu0 %v473, 12
      %v598 = vpop.permute.xlu0 %597
      %599 = vrot.lane.b32.xlu0 %v474, 12
      %v600 = vpop.permute.xlu0 %599
      %v602 = vshrl.u32 %v474, 16
      %v604 = vshll.u32 %v474, 16
      %v606 = vrot.slane %v604, 1
      %v607 = vor.u32 %v602, %v606
      %608 = vrot.lane.b32.xlu0 %v493, 16
      %v609 = vpop.permute.xlu0 %608
      %610 = vrot.lane.b32.xlu0 %v500, 16
      %v611 = vpop.permute.xlu0 %610
      %612 = vrot.lane.b32.xlu0 %v507, 16
      %v613 = vpop.permute.xlu0 %612
      %614 = vrot.lane.b32.xlu0 %v514, 16
      %v615 = vpop.permute.xlu0 %614
      %616 = vrot.lane.b32.xlu0 %v521, 16
      %v617 = vpop.permute.xlu0 %616
      %618 = vrot.lane.b32.xlu0 %v528, 16
      %v619 = vpop.permute.xlu0 %618
      %620 = vrot.lane.b32.xlu0 %v535, 16
      %v621 = vpop.permute.xlu0 %620
      %622 = vrot.lane.b32.xlu0 %v607, 16
      %v623 = vpop.permute.xlu0 %622
      %v624 = vrot.slane %v474, 1
      %625 = vrot.lane.b32.xlu0 %v561, 20
      %v626 = vpop.permute.xlu0 %625
      %627 = vrot.lane.b32.xlu0 %v562, 20
      %v628 = vpop.permute.xlu0 %627
      %629 = vrot.lane.b32.xlu0 %v563, 20
      %v630 = vpop.permute.xlu0 %629
      %631 = vrot.lane.b32.xlu0 %v564, 20
      %v632 = vpop.permute.xlu0 %631
      %633 = vrot.lane.b32.xlu0 %v565, 20
      %v634 = vpop.permute.xlu0 %633
      %635 = vrot.lane.b32.xlu0 %v566, 20
      %v636 = vpop.permute.xlu0 %635
      %637 = vrot.lane.b32.xlu0 %v567, 20
      %v638 = vpop.permute.xlu0 %637
      %639 = vrot.lane.b32.xlu0 %v624, 20
      %v640 = vpop.permute.xlu0 %639
      %641 = vrot.lane.b32.xlu0 %v468, 24
      %v642 = vpop.permute.xlu0 %641
      %643 = vrot.lane.b32.xlu0 %v469, 24
      %v644 = vpop.permute.xlu0 %643
      %645 = vrot.lane.b32.xlu0 %v470, 24
      %v646 = vpop.permute.xlu0 %645
      %647 = vrot.lane.b32.xlu0 %v471, 24
      %v648 = vpop.permute.xlu0 %647
      %649 = vrot.lane.b32.xlu0 %v472, 24
      %v650 = vpop.permute.xlu0 %649
      %651 = vrot.lane.b32.xlu0 %v473, 24
      %v652 = vpop.permute.xlu0 %651
      %653 = vrot.lane.b32.xlu0 %v474, 24
      %v654 = vpop.permute.xlu0 %653
      %655 = vrot.lane.b32.xlu0 %v466, 24
      %v656 = vpop.permute.xlu0 %655
      %657 = vrot.lane.b32.xlu0 %v500, 28
      %v658 = vpop.permute.xlu0 %657
      %659 = vrot.lane.b32.xlu0 %v507, 28
      %v660 = vpop.permute.xlu0 %659
      %661 = vrot.lane.b32.xlu0 %v514, 28
      %v662 = vpop.permute.xlu0 %661
      %663 = vrot.lane.b32.xlu0 %v521, 28
      %v664 = vpop.permute.xlu0 %663
      %665 = vrot.lane.b32.xlu0 %v528, 28
      %v666 = vpop.permute.xlu0 %665
      %667 = vrot.lane.b32.xlu0 %v535, 28
      %v668 = vpop.permute.xlu0 %667
      %669 = vrot.lane.b32.xlu0 %v607, 28
      %v670 = vpop.permute.xlu0 %669
      %671 = vrot.lane.b32.xlu0 %v486, 28
      %v672 = vpop.permute.xlu0 %671
      %673 = vrot.lane.b32.xlu0 %v562, 32
      %v674 = vpop.permute.xlu0 %673
      %675 = vrot.lane.b32.xlu0 %v563, 32
      %v676 = vpop.permute.xlu0 %675
      %677 = vrot.lane.b32.xlu0 %v564, 32
      %v678 = vpop.permute.xlu0 %677
      %679 = vrot.lane.b32.xlu0 %v565, 32
      %v680 = vpop.permute.xlu0 %679
      %681 = vrot.lane.b32.xlu0 %v566, 32
      %v682 = vpop.permute.xlu0 %681
      %683 = vrot.lane.b32.xlu0 %v567, 32
      %v684 = vpop.permute.xlu0 %683
      %685 = vrot.lane.b32.xlu0 %v624, 32
      %v686 = vpop.permute.xlu0 %685
      %687 = vrot.lane.b32.xlu0 %v560, 32
      %v688 = vpop.permute.xlu0 %687
      %vm689 = vcmask 31744
      %v691 = vsel %vm689, %v466, %v537
      %v693 = vsel %vm689, %v467, %v539
      %v695 = vsel %vm689, %v468, %v541
      %v697 = vsel %vm689, %v469, %v543
      %v699 = vsel %vm689, %v470, %v545
      %v701 = vsel %vm689, %v471, %v547
      %v703 = vsel %vm689, %v472, %v549
      %v705 = vsel %vm689, %v473, %v551
      %vm706 = vcmask 64512
      %v708 = vsel %vm706, %v691, %v569
      %v710 = vsel %vm706, %v693, %v571
      %v712 = vsel %vm706, %v695, %v573
      %v714 = vsel %vm706, %v697, %v575
      %v716 = vsel %vm706, %v699, %v577
      %v718 = vsel %vm706, %v701, %v579
      %v720 = vsel %vm706, %v703, %v581
      %v722 = vsel %vm706, %v705, %v583
      %vm723 = vcmask 97280
      %v725 = vsel %vm723, %v708, %v586
      %v727 = vsel %vm723, %v710, %v588
      %v729 = vsel %vm723, %v712, %v590
      %v731 = vsel %vm723, %v714, %v592
      %v733 = vsel %vm723, %v716, %v594
      %v735 = vsel %vm723, %v718, %v596
      %v737 = vsel %vm723, %v720, %v598
      %v739 = vsel %vm723, %v722, %v600
      %vm740 = vcmask 130048
      %v742 = vsel %vm740, %v725, %v609
      %v744 = vsel %vm740, %v727, %v611
      %v746 = vsel %vm740, %v729, %v613
      %v748 = vsel %vm740, %v731, %v615
      %v750 = vsel %vm740, %v733, %v617
      %v752 = vsel %vm740, %v735, %v619
      %v754 = vsel %vm740, %v737, %v621
      %v756 = vsel %vm740, %v739, %v623
      %vm757 = vcmask 162816
      %v759 = vsel %vm757, %v742, %v626
      %v761 = vsel %vm757, %v744, %v628
      %v763 = vsel %vm757, %v746, %v630
      %v765 = vsel %vm757, %v748, %v632
      %v767 = vsel %vm757, %v750, %v634
      %v769 = vsel %vm757, %v752, %v636
      %v771 = vsel %vm757, %v754, %v638
      %v773 = vsel %vm757, %v756, %v640
      %vm774 = vcmask 195584
      %v776 = vsel %vm774, %v759, %v642
      %v778 = vsel %vm774, %v761, %v644
      %v780 = vsel %vm774, %v763, %v646
      %v782 = vsel %vm774, %v765, %v648
      %v784 = vsel %vm774, %v767, %v650
      %v786 = vsel %vm774, %v769, %v652
      %v788 = vsel %vm774, %v771, %v654
      %v790 = vsel %vm774, %v773, %v656
      %vm791 = vcmask 228352
      %v793 = vsel %vm791, %v776, %v658
      %v795 = vsel %vm791, %v778, %v660
      %v797 = vsel %vm791, %v780, %v662
      %v799 = vsel %vm791, %v782, %v664
      %v801 = vsel %vm791, %v784, %v666
      %v803 = vsel %vm791, %v786, %v668
      %v805 = vsel %vm791, %v788, %v670
      %v807 = vsel %vm791, %v790, %v672
      %vm808 = vcmask 261120
      %v810 = vsel %vm808, %v793, %v674
      %v812 = vsel %vm808, %v795, %v676
      %v814 = vsel %vm808, %v797, %v678
      %v816 = vsel %vm808, %v799, %v680
      %v818 = vsel %vm808, %v801, %v682
      %v820 = vsel %vm808, %v803, %v684
      %v822 = vsel %vm808, %v805, %v686
      %v824 = vsel %vm808, %v807, %v688
      %v833 = vunpack.c.l.b16 %v810
      %v834 = vunpack.c.l.b16 %v812
      %v835 = vunpack.c.l.b16 %v814
      %v836 = vunpack.c.l.b16 %v816
      %v837 = vunpack.c.l.b16 %v818
      %v838 = vunpack.c.l.b16 %v820
      %v839 = vunpack.c.l.b16 %v822
      %v840 = vunpack.c.l.b16 %v824
      %v841 = vpack.c.b16 %v834, %v833
      %v842 = vpack.c.b16 %v836, %v835
      %v843 = vpack.c.b16 %v838, %v837
      %v844 = vpack.c.b16 %v840, %v839
      %v850 = vunpack.c.l.b16 %v475
      %v851 = vunpack.c.l.b16 %v476
      %v852 = vunpack.c.l.b16 %v477
      %v853 = vunpack.c.l.b16 %v478
      %v854 = vunpack.c.l.b16 %v479
      %v855 = vpack.c.b16 %v851, %v850
      %v856 = vpack.c.b16 %v853, %v852
      %v857 = vpack.c.b16 %v854, %v854
      %vm860 = vcmask 293888
      %v862 = vsel %vm860, %v841, 0
      %v865 = vsel %vm860, %v842, 0
      %v868 = vsel %vm860, %v843, 0
      %v871 = vsel %vm860, %v844, 0
      %vm873 = vcmask 1041408
      %v875 = vsel %vm873, %v857, 0
      %877 = vmatprep.subr.bf16.mxu0 0
      %878 = vmatpush1.bf16.msra.mxu0 0
      %879 = vmatprep.subr.bf16.mxu0 0
      %880 = vmatpush1.bf16.msra.mxu0 0
      %881 = vmatprep.subr.bf16.mxu0 0
      %882 = vmatpush1.bf16.msra.mxu0 0
      %883 = vmatprep.subr.bf16.mxu0 0
      %884 = vmatpush1.bf16.msra.mxu0 0
      %885 = vmatprep.subr.bf16.mxu0 0
      %886 = vmatpush1.bf16.msra.mxu0 0
      %887 = vmatprep.subr.bf16.mxu0 0
      %888 = vmatpush1.bf16.msra.mxu0 %v875
      %889 = vmatprep.subr.bf16.mxu0 0
      %890 = vmatpush1.bf16.msra.mxu0 %v856
      %891 = vmatprep.subr.bf16.mxu0 0
      %892 = vmatpush1.bf16.msra.mxu0 %v855
      %893 = vmatprep.subr.bf16.mxu0 0
      %894 = vmatpush2.bf16.msra.mxu0 0
      %895 = vmatprep.subr.bf16.mxu0 0
      %896 = vmatpush2.bf16.msra.mxu0 0
      %897 = vmatprep.subr.bf16.mxu0 0
      %898 = vmatpush2.bf16.msra.mxu0 0
      %899 = vmatprep.subr.bf16.mxu0 0
      %900 = vmatpush2.bf16.msra.mxu0 0
      %901 = vmatprep.subr.bf16.mxu0 0
      %902 = vmatpush2.bf16.msra.mxu0 0
      %903 = vmatprep.subr.bf16.mxu0 0
      %904 = vmatpush2.bf16.msra.mxu0 0
      %905 = vmatprep.subr.bf16.mxu0 0
      %906 = vmatpush2.bf16.msra.mxu0 0
      %907 = vmatprep.subr.bf16.mxu0 0
      %908 = vmatpush2.bf16.msra.mxu0 0
      %909 = vmatprep.mubr.bf16.mxu0 0
      %910 = vmatmul.mubr.bf16.gmra.mxu0 %v862
      %v911 = vpop.f32.mrf.mxu0
      %v912 = vadd.f32 0.0, %v911
      %v913 = vpop.f32.mrf.mxu0
      %v914 = vpop.f32.mrf.mxu0
      %v915 = vadd.f32 0.0, %v914
      %v916 = vpop.f32.mrf.mxu0
      %917 = vmatprep.mubr.bf16.mxu0 0
      %918 = vmatmul.mubr.bf16.gmra.mxu0 %v865
      %v919 = vpop.f32.mrf.mxu0
      %v920 = vadd.f32 0.0, %v919
      %v921 = vpop.f32.mrf.mxu0
      %v922 = vpop.f32.mrf.mxu0
      %v923 = vadd.f32 0.0, %v922
      %v924 = vpop.f32.mrf.mxu0
      %925 = vmatprep.mubr.bf16.mxu0 0
      %926 = vmatmul.mubr.bf16.gmra.mxu0 %v868
      %v927 = vpop.f32.mrf.mxu0
      %v928 = vadd.f32 0.0, %v927
      %v929 = vpop.f32.mrf.mxu0
      %v930 = vpop.f32.mrf.mxu0
      %v931 = vadd.f32 0.0, %v930
      %v932 = vpop.f32.mrf.mxu0
      %933 = vmatprep.mubr.bf16.mxu0 0
      %934 = vmatmul.mubr.bf16.gmra.mxu0 %v871
      %v935 = vpop.f32.mrf.mxu0
      %v936 = vadd.f32 0.0, %v935
      %v937 = vpop.f32.mrf.mxu0
      %v938 = vpop.f32.mrf.mxu0
      %v939 = vadd.f32 0.0, %v938
      %v940 = vpop.f32.mrf.mxu0
      %941 = vdwg.mxu0
      %v942 = vadd.f32 %v912, %v915
      %v943 = vadd.f32 %v942, %v920
      %v944 = vadd.f32 %v943, %v923
      %v945 = vadd.f32 %v944, %v928
      %v946 = vadd.f32 %v945, %v931
      %v947 = vadd.f32 %v946, %v936
      %v948 = vadd.f32 %v947, %v939
      %v949 = vrot.slane %v948, 4
      %v950 = vadd.f32 %v948, %v949
      %v951 = vrot.slane %v950, 2
      %v952 = vadd.f32 %v950, %v951
      %v953 = vrot.slane %v952, 1
      %v954 = vadd.f32 %v952, %v953
      %v955 = vadd.f32 %v954, 0.0
      %v956 = vmul.f32 %v912, %v912
      %v957 = vmul.f32 %v915, %v915
      %v958 = vmul.f32 %v920, %v920
      %v959 = vmul.f32 %v923, %v923
      %v960 = vmul.f32 %v928, %v928
      %v961 = vmul.f32 %v931, %v931
      %v962 = vmul.f32 %v936, %v936
      %v963 = vmul.f32 %v939, %v939
      %v964 = vadd.f32 %v956, %v957
      %v965 = vadd.f32 %v964, %v958
      %v966 = vadd.f32 %v965, %v959
      %v967 = vadd.f32 %v966, %v960
      %v968 = vadd.f32 %v967, %v961
      %v969 = vadd.f32 %v968, %v962
      %v970 = vadd.f32 %v969, %v963
      %v971 = vrot.slane %v970, 4
      %v972 = vadd.f32 %v970, %v971
      %v973 = vrot.slane %v972, 2
      %v974 = vadd.f32 %v972, %v973
      %v975 = vrot.slane %v974, 1
      %v976 = vadd.f32 %v974, %v975
      %v977 = vadd.f32 %v976, 0.0
      %v978 = vpack.c.bf16 %v912, %v912
      %v979 = vpack.c.bf16 %v915, %v915
      %v980 = vpack.c.bf16 %v920, %v920
      %v981 = vpack.c.bf16 %v923, %v923
      %v982 = vpack.c.bf16 %v928, %v928
      %v983 = vpack.c.bf16 %v931, %v931
      %v984 = vpack.c.bf16 %v936, %v936
      %v985 = vpack.c.bf16 %v939, %v939
      %986 = vst [vmem:[%s231] sm:$0xf] %v978
      %987 = vst [vmem:[%s231 + $0x4] sm:$0xf] %v979
      %988 = vst [vmem:[%s231 + $0x8] sm:$0xf] %v980
      %989 = vst [vmem:[%s231 + $0xc] sm:$0xf] %v981
      %990 = vst [vmem:[%s231 + $0x10] sm:$0xf] %v982
      %991 = vst [vmem:[%s231 + $0x14] sm:$0xf] %v983
      %992 = vst [vmem:[%s231 + $0x18] sm:$0xf] %v984
      %993 = vst [vmem:[%s231 + $0x1c] sm:$0xf] %v985
      %vm994 = vcmask 1040384
      %v995 = vsel %vm994, %v955, %v977
      %996 = vst [vmem:[%s235] sm:$0x3] %v995
      %p997 = scmp.lt.s32.totalorder %s17, 1
      %s998 = scalar_select %p997, %s17, 1
      %s999 = smul.addr %s998, 8
      %s1000 = smul.addr %s999, 4
      %s1001 = scalar_lea.vmem %s4, %s1000
      %p1002 = scmp.lt.s32.totalorder %s17, 1
      %s1003 = scalar_select %p1002, %s17, 1
      %s1004 = smul.addr %s1003, 2
      %s1005 = scalar_lea.vmem %s5, %s1004
      // Predicated region
      $region37: #{down_block.3} parent=35 // pred_check
        %p1006 = pneg %p124
      $region38: #{down_block.3} parent=35 // pred_check_branch
        %1008 = sbr.rel (%p1006) target = $region40
      $region39: #{down_block.3} parent=35 // pred_region
        _
      $region40: #{down_block.3} parent=35 // pred_fallthru
        _
      // Predicated region
      $region41: #{down_block.3} parent=35 // pred_check
        %p1009 = pneg %p150
      $region42: #{down_block.3} parent=35 // pred_check_branch
        %1011 = sbr.rel (%p1009) target = $region44
      $region43: #{down_block.3} parent=35 // pred_region
        _
      $region44: #{down_block.3} parent=35 // pred_fallthru
        _
    $region36: #{down_block.3} parent=5 // pred_fallthru
      _
    %p1012 = scmp.le.s32.totalorder 2, %s12
    // Predicated region
    $region45: #{down_block.3} parent=5 // pred_check
      %p1013 = pneg %p1012
    $region46: #{down_block.3} parent=5 // pred_check_branch
      %1015 = sbr.rel (%p1013) target = $region48
    $region47: #{down_block.3} parent=5 // pred_region
      %s1016 = ssub.s32 %s12, 2
      // Predicated region
      $region49: #{down_block.3} parent=47 // pred_check
        %p1017 = pneg %p130
      $region50: #{down_block.3} parent=47 // pred_check_branch
        %1019 = sbr.rel (%p1017) target = $region52
      $region51: #{down_block.3} parent=47 // pred_region
        %p1020 = scmp.lt.s32.totalorder %s18, 1
        %s1021 = scalar_select %p1020, %s18, 1
        %s1022 = smul.addr %s1021, 8
        %s1023 = smul.addr %s1022, 4
        %s1024 = scalar_lea.vmem %s4, %s1023
      $region52: #{down_block.3} parent=47 // pred_fallthru
        _
      // Predicated region
      $region53: #{down_block.3} parent=47 // pred_check
        %p1025 = pneg %p156
      $region54: #{down_block.3} parent=47 // pred_check_branch
        %1027 = sbr.rel (%p1025) target = $region56
      $region55: #{down_block.3} parent=47 // pred_region
        %p1028 = scmp.lt.s32.totalorder %s18, 1
        %s1029 = scalar_select %p1028, %s18, 1
        %s1030 = smul.addr %s1029, 2
        %s1031 = scalar_lea.vmem %s5, %s1030
      $region56: #{down_block.3} parent=47 // pred_fallthru
        _
    $region48: #{down_block.3} parent=5 // pred_fallthru
      _
  $region6: #{down_block.3} parent=0 // loop_footer
    %s16 = sadd.s32 1, %s12
  $region7: #{down_block.3} parent=0 // loop_footer_branch
    %11 = sbr.rel target = $region3
  $region8: #{down_block.3} parent=0 // loop_exit
    _

// kernel: down_block.4
$region0: #{down_block.4}
  #allocation0 [shape = 'u32[]', space=smem, size = 0x4, offset = 0x4, fixed_abs, tag = 'smem constant byte address 0x4 - core index']
  #allocation1 [shape = 'u32[144,128]{1,0:T(1,128)}', space=vmem, size = 0x12000, scoped, tag = 'internal scratch']
  %s0 = inlined_call_operand.vmem [shape: bf16[2,8,8,128], index: 0, kind: input, shape index: {}]
  %s1 = inlined_call_operand.vmem [shape: f32[1,128], index: 1, kind: input, shape index: {}]
  %s2 = inlined_call_operand.vmem [shape: f32[1,128], index: 2, kind: input, shape index: {}]
  %s3 = inlined_call_operand.vmem [shape: bf16[1152,128], index: 3, kind: input, shape index: {}]
  %s4 = inlined_call_operand.vmem [shape: bf16[2,8,8,128], index: 4, kind: output, shape index: {0}]
  %s5 = inlined_call_operand.vmem [shape: f32[2,2,128], index: 5, kind: output, shape index: {1}]
  %6 = xla_tuple %s4, %s5
  %s7 = sld [smem:[#allocation0]]
  $region57: #{down_block.4} parent=0
    _
  %s9 = ssub.s32 1, %s7
  %s10 = scalar_select 0, %s9, %s7
  loop: start=0, step=1, limit=4
  $region2: #{down_block.4} parent=0 // loop_pre_header
    _
  $region3: #{down_block.4} parent=0 // loop_header
    %s12 = sphi 0, %s16
    %p13 = scmp.ge.s32.totalorder %s12, 4
    %s22 = sphi 0, %s24
    %s25 = sphi 0, %s22
    %s26 = sphi 0, %s25
    %s42 = sphi 0, %s26
    %s46 = sphi 0, %s46
    %s48 = sphi 0, %s46
    %s49 = sphi 0, %s48
    %s63 = sphi 0, %s49
    %s67 = sphi 0, %s67
    %s69 = sphi 0, %s67
    %s70 = sphi 0, %s69
    %s84 = sphi 0, %s70
    %s88 = sphi 0, %s88
    %s90 = sphi 0, %s88
    %s91 = sphi 0, %s90
    %s105 = sphi 0, %s91
    %s111 = sphi 0, %s113
    %s114 = sphi 0, %s111
    %s115 = sphi 0, %s114
    %s131 = sphi 0, %s115
    %s137 = sphi 0, %s139
    %s140 = sphi 0, %s137
    %s141 = sphi 0, %s140
    %s157 = sphi 0, %s141
  $region4: #{down_block.4} parent=0 // loop_header_branch
    %15 = sbr.rel (%p13) target = $region8
  $region5: #{down_block.4} parent=0 // loop_body
    %s17 = ssub.s32 %s12, 1
    %s18 = ssub.s32 %s12, 2
    %s19 = sadd.s32 %s12, 1
    %s20 = ssub.s32 %s12, %s19
    %p21 = scmp.eq.s32.totalorder %s20, 0
    %s23 = sadd.s32 %s22, 1
    %s24 = scalar_select %p21, %s22, %s23
    %p27 = pneg %p21
    %p28 = scmp.eq.s32.totalorder %s12, 1
    %p29 = por %p27, %p28
    %p30 = scmp.ne.s32.totalorder %s22, %s25
    %p31 = scmp.eq.s32.totalorder %s12, 0
    %p32 = por %p30, %p31
    %p33 = scmp.ne.s32.totalorder %s22, %s25
    %p34 = scmp.eq.s32.totalorder %s17, 1
    %p35 = por %p33, %p34
    %p36 = scmp.ne.s32.totalorder %s25, %s26
    %p37 = scmp.eq.s32.totalorder %s17, 0
    %p38 = por %p36, %p37
    %p39 = scmp.ne.s32.totalorder %s25, %s26
    %p40 = scmp.eq.s32.totalorder %s18, 1
    %p41 = por %p39, %p40
    %p43 = scmp.ne.s32.totalorder %s26, %s42
    %p44 = scmp.eq.s32.totalorder %s18, 0
    %p45 = por %p43, %p44
    %s47 = sadd.s32 %s46, 1
    %p50 = scmp.eq.s32.totalorder %s12, 1
    %p51 = scmp.ne.s32.totalorder %s46, %s48
    %p52 = scmp.eq.s32.totalorder %s12, 0
    %p53 = por %p51, %p52
    %p54 = scmp.ne.s32.totalorder %s46, %s48
    %p55 = scmp.eq.s32.totalorder %s17, 1
    %p56 = por %p54, %p55
    %p57 = scmp.ne.s32.totalorder %s48, %s49
    %p58 = scmp.eq.s32.totalorder %s17, 0
    %p59 = por %p57, %p58
    %p60 = scmp.ne.s32.totalorder %s48, %s49
    %p61 = scmp.eq.s32.totalorder %s18, 1
    %p62 = por %p60, %p61
    %p64 = scmp.ne.s32.totalorder %s49, %s63
    %p65 = scmp.eq.s32.totalorder %s18, 0
    %p66 = por %p64, %p65
    %s68 = sadd.s32 %s67, 1
    %p71 = scmp.eq.s32.totalorder %s12, 1
    %p72 = scmp.ne.s32.totalorder %s67, %s69
    %p73 = scmp.eq.s32.totalorder %s12, 0
    %p74 = por %p72, %p73
    %p75 = scmp.ne.s32.totalorder %s67, %s69
    %p76 = scmp.eq.s32.totalorder %s17, 1
    %p77 = por %p75, %p76
    %p78 = scmp.ne.s32.totalorder %s69, %s70
    %p79 = scmp.eq.s32.totalorder %s17, 0
    %p80 = por %p78, %p79
    %p81 = scmp.ne.s32.totalorder %s69, %s70
    %p82 = scmp.eq.s32.totalorder %s18, 1
    %p83 = por %p81, %p82
    %p85 = scmp.ne.s32.totalorder %s70, %s84
    %p86 = scmp.eq.s32.totalorder %s18, 0
    %p87 = por %p85, %p86
    %s89 = sadd.s32 %s88, 1
    %p92 = scmp.eq.s32.totalorder %s12, 1
    %p93 = scmp.ne.s32.totalorder %s88, %s90
    %p94 = scmp.eq.s32.totalorder %s12, 0
    %p95 = por %p93, %p94
    %p96 = scmp.ne.s32.totalorder %s88, %s90
    %p97 = scmp.eq.s32.totalorder %s17, 1
    %p98 = por %p96, %p97
    %p99 = scmp.ne.s32.totalorder %s90, %s91
    %p100 = scmp.eq.s32.totalorder %s17, 0
    %p101 = por %p99, %p100
    %p102 = scmp.ne.s32.totalorder %s90, %s91
    %p103 = scmp.eq.s32.totalorder %s18, 1
    %p104 = por %p102, %p103
    %p106 = scmp.ne.s32.totalorder %s91, %s105
    %p107 = scmp.eq.s32.totalorder %s18, 0
    %p108 = por %p106, %p107
    %s109 = ssub.s32 %s12, %s19
    %p110 = scmp.eq.s32.totalorder %s109, 0
    %s112 = sadd.s32 %s111, 1
    %s113 = scalar_select %p110, %s111, %s112
    %p116 = pneg %p110
    %p117 = scmp.eq.s32.totalorder %s12, 1
    %p118 = por %p116, %p117
    %p119 = scmp.ne.s32.totalorder %s111, %s114
    %p120 = scmp.eq.s32.totalorder %s12, 0
    %p121 = por %p119, %p120
    %p122 = scmp.ne.s32.totalorder %s111, %s114
    %p123 = scmp.eq.s32.totalorder %s17, 1
    %p124 = por %p122, %p123
    %p125 = scmp.ne.s32.totalorder %s114, %s115
    %p126 = scmp.eq.s32.totalorder %s17, 0
    %p127 = por %p125, %p126
    %p128 = scmp.ne.s32.totalorder %s114, %s115
    %p129 = scmp.eq.s32.totalorder %s18, 1
    %p130 = por %p128, %p129
    %p132 = scmp.ne.s32.totalorder %s115, %s131
    %p133 = scmp.eq.s32.totalorder %s18, 0
    %p134 = por %p132, %p133
    %s135 = ssub.s32 %s12, %s19
    %p136 = scmp.eq.s32.totalorder %s135, 0
    %s138 = sadd.s32 %s137, 1
    %s139 = scalar_select %p136, %s137, %s138
    %p142 = pneg %p136
    %p143 = scmp.eq.s32.totalorder %s12, 1
    %p144 = por %p142, %p143
    %p145 = scmp.ne.s32.totalorder %s137, %s140
    %p146 = scmp.eq.s32.totalorder %s12, 0
    %p147 = por %p145, %p146
    %p148 = scmp.ne.s32.totalorder %s137, %s140
    %p149 = scmp.eq.s32.totalorder %s17, 1
    %p150 = por %p148, %p149
    %p151 = scmp.ne.s32.totalorder %s140, %s141
    %p152 = scmp.eq.s32.totalorder %s17, 0
    %p153 = por %p151, %p152
    %p154 = scmp.ne.s32.totalorder %s140, %s141
    %p155 = scmp.eq.s32.totalorder %s18, 1
    %p156 = por %p154, %p155
    %p158 = scmp.ne.s32.totalorder %s141, %s157
    %p159 = scmp.eq.s32.totalorder %s18, 0
    %p160 = por %p158, %p159
    %p161 = scmp.le.s32.totalorder 1, %s12
    %p162 = scmp.lt.s32.totalorder %s12, 3
    %p163 = pnand %p161, %p162
    %p164 = pneg %p163
    // Predicated region
    $region9: #{down_block.4} parent=5 // pred_check
      _
    $region10: #{down_block.4} parent=5 // pred_check_branch
      %166 = sbr.rel (%p163) target = $region12
    $region11: #{down_block.4} parent=5 // pred_region
      %s167 = ssub.s32 %s12, 1
      // Predicated region
      $region13: #{down_block.4} parent=11 // pred_check
        %p168 = pneg %p59
      $region14: #{down_block.4} parent=11 // pred_check_branch
        %170 = sbr.rel (%p168) target = $region16
      $region15: #{down_block.4} parent=11 // pred_region
        _
      $region16: #{down_block.4} parent=11 // pred_fallthru
        _
      // Predicated region
      $region17: #{down_block.4} parent=11 // pred_check
        %p171 = pneg %p80
      $region18: #{down_block.4} parent=11 // pred_check_branch
        %173 = sbr.rel (%p171) target = $region20
      $region19: #{down_block.4} parent=11 // pred_region
        _
      $region20: #{down_block.4} parent=11 // pred_fallthru
        _
      // Predicated region
      $region21: #{down_block.4} parent=11 // pred_check
        %p174 = pneg %p101
      $region22: #{down_block.4} parent=11 // pred_check_branch
        %176 = sbr.rel (%p174) target = $region24
      $region23: #{down_block.4} parent=11 // pred_region
        _
      $region24: #{down_block.4} parent=11 // pred_fallthru
        _
    $region12: #{down_block.4} parent=5 // pred_fallthru
      _
    %p177 = scmp.lt.s32.totalorder %s12, 2
    // Predicated region
    $region25: #{down_block.4} parent=5 // pred_check
      %p178 = pneg %p177
    $region26: #{down_block.4} parent=5 // pred_check_branch
      %180 = sbr.rel (%p178) target = $region28
    $region27: #{down_block.4} parent=5 // pred_region
      // Predicated region
      $region29: #{down_block.4} parent=27 // pred_check
        %p181 = pneg %p32
      $region30: #{down_block.4} parent=27 // pred_check_branch
        %183 = sbr.rel (%p181) target = $region32
      $region31: #{down_block.4} parent=27 // pred_region
        %p184 = scmp.lt.s32.totalorder %s12, 1
        %s185 = scalar_select %p184, %s12, 1
        %s186 = smul.addr %s185, 8
        %s187 = smul.addr %s186, 4
        %s188 = scalar_lea.vmem %s0, %s187
      $region32: #{down_block.4} parent=27 // pred_fallthru
        _
    $region28: #{down_block.4} parent=5 // pred_fallthru
      _
    %p189 = scmp.le.s32.totalorder 1, %s12
    %p190 = scmp.lt.s32.totalorder %s12, 3
    %p191 = pnand %p189, %p190
    %p192 = pneg %p191
    // Predicated region
    $region33: #{down_block.4} parent=5 // pred_check
      _
    $region34: #{down_block.4} parent=5 // pred_check_branch
      %194 = sbr.rel (%p191) target = $region36
    $region35: #{down_block.4} parent=5 // pred_region
      %s195 = ssub.s32 %s12, 1
      %p196 = scmp.lt.s32.totalorder %s17, 1
      %s197 = scalar_select %p196, %s17, 1
      %s198 = smul.addr %s197, 8
      %s199 = smul.addr %s198, 4
      %s200 = scalar_lea.vmem %s0, %s199
      %p201 = pneg %p38
      %p202 = pneg %p35
      %p203 = pneg %p59
      %p204 = pneg %p56
      %p205 = pneg %p80
      %p206 = pneg %p77
      %p207 = pneg %p101
      %p208 = pneg %p98
      %p209 = pneg %p127
      %p210 = pneg %p124
      %p211 = scmp.lt.s32.totalorder %s17, 1
      %s212 = scalar_select %p211, %s17, 1
      %s213 = smul.addr %s212, 8
      %s214 = smul.addr %s213, 4
      %s215 = scalar_lea.vmem %s4, %s214
      %p216 = pneg %p153
      %p217 = pneg %p150
      %p218 = scmp.lt.s32.totalorder %s17, 1
      %s219 = scalar_select %p218, %s17, 1
      %s220 = smul.addr %s219, 2
      %s221 = scalar_lea.vmem %s5, %s220
      %p222 = scmp.lt.s32.totalorder %s17, 1
      %s223 = scalar_select %p222, %s17, 1
      %s224 = smul.addr %s223, 8
      %s225 = smul.addr %s224, 4
      %s226 = scalar_lea.vmem %s0, %s225
      %p227 = scmp.lt.s32.totalorder %s17, 1
      %s228 = scalar_select %p227, %s17, 1
      %s229 = smul.addr %s228, 8
      %s230 = smul.addr %s229, 4
      %s231 = scalar_lea.vmem %s4, %s230
      %p232 = scmp.lt.s32.totalorder %s17, 1
      %s233 = scalar_select %p232, %s17, 1
      %s234 = smul.addr %s233, 2
      %s235 = scalar_lea.vmem %s5, %s234
      %v237 = vld [vmem:[%s226] sm:$0xf]
      %v238 = vld [vmem:[%s226 + $0x4] sm:$0xf]
      %v239 = vld [vmem:[%s226 + $0x8] sm:$0xf]
      %v240 = vld [vmem:[%s226 + $0xc] sm:$0xf]
      %v241 = vld [vmem:[%s226 + $0x10] sm:$0xf]
      %v242 = vld [vmem:[%s226 + $0x14] sm:$0xf]
      %v243 = vld [vmem:[%s226 + $0x18] sm:$0xf]
      %v244 = vld [vmem:[%s226 + $0x1c] sm:$0xf]
      %v245 = vunpack.c.l.bf16 %v237
      %v246 = vunpack.c.l.bf16 %v238
      %v247 = vunpack.c.l.bf16 %v239
      %v248 = vunpack.c.l.bf16 %v240
      %v249 = vunpack.c.l.bf16 %v241
      %v250 = vunpack.c.l.bf16 %v242
      %v251 = vunpack.c.l.bf16 %v243
      %v252 = vunpack.c.l.bf16 %v244
      %v253 = vld [vmem:[%s1] sm:$0x1]
      %v255 = vlaneseq
      %v256 = vshrl.u32 %v255, 7
      %v257 = vsub.s32 0, %v256
      %v258 = vrot.slane %v253, %v257
      %v260 = vmul.f32 %v245, %v258
      %v261 = vmul.f32 %v246, %v258
      %v262 = vmul.f32 %v247, %v258
      %v263 = vmul.f32 %v248, %v258
      %v264 = vmul.f32 %v249, %v258
      %v265 = vmul.f32 %v250, %v258
      %v266 = vmul.f32 %v251, %v258
      %v267 = vmul.f32 %v252, %v258
      %v268 = vld [vmem:[%s2] sm:$0x1]
      %v270 = vlaneseq
      %v271 = vshrl.u32 %v270, 7
      %v272 = vsub.s32 0, %v271
      %v273 = vrot.slane %v268, %v272
      %v275 = vadd.f32 %v260, %v273
      %v276 = vadd.f32 %v261, %v273
      %v277 = vadd.f32 %v262, %v273
      %v278 = vadd.f32 %v263, %v273
      %v279 = vadd.f32 %v264, %v273
      %v280 = vadd.f32 %v265, %v273
      %v281 = vadd.f32 %v266, %v273
      %v282 = vadd.f32 %v267, %v273
      %v283 = vmax.f32 %v275, 0.0
      %v284 = vmax.f32 %v276, 0.0
      %v285 = vmax.f32 %v277, 0.0
      %v286 = vmax.f32 %v278, 0.0
      %v287 = vmax.f32 %v279, 0.0
      %v288 = vmax.f32 %v280, 0.0
      %v289 = vmax.f32 %v281, 0.0
      %v290 = vmax.f32 %v282, 0.0
      %v291 = vpack.c.bf16 %v283, %v283
      %v292 = vpack.c.bf16 %v284, %v284
      %v293 = vpack.c.bf16 %v285, %v285
      %v294 = vpack.c.bf16 %v286, %v286
      %v295 = vpack.c.bf16 %v287, %v287
      %v296 = vpack.c.bf16 %v288, %v288
      %v297 = vpack.c.bf16 %v289, %v289
      %v298 = vpack.c.bf16 %v290, %v290
      %v300 = vshrl.u32 0, 16
      %v302 = vrot.slane %v300, 7
      %v303 = vshll.u32 0, 16
      %v305 = vor.u32 %v302, %v303
      %v307 = vshrl.u32 %v291, 16
      %v309 = vrot.slane %v307, 7
      %v310 = vshll.u32 %v291, 16
      %v312 = vor.u32 %v309, %v310
      %v314 = vshrl.u32 %v292, 16
      %v316 = vrot.slane %v314, 7
      %v317 = vshll.u32 %v292, 16
      %v319 = vor.u32 %v316, %v317
      %v321 = vshrl.u32 %v293, 16
      %v323 = vrot.slane %v321, 7
      %v324 = vshll.u32 %v293, 16
      %v326 = vor.u32 %v323, %v324
      %v328 = vshrl.u32 %v294, 16
      %v330 = vrot.slane %v328, 7
      %v331 = vshll.u32 %v294, 16
      %v333 = vor.u32 %v330, %v331
      %v335 = vshrl.u32 %v295, 16
      %v337 = vrot.slane %v335, 7
      %v338 = vshll.u32 %v295, 16
      %v340 = vor.u32 %v337, %v338
      %v342 = vshrl.u32 %v296, 16
      %v344 = vrot.slane %v342, 7
      %v345 = vshll.u32 %v296, 16
      %v347 = vor.u32 %v344, %v345
      %v349 = vshrl.u32 %v297, 16
      %v351 = vrot.slane %v349, 7
      %v352 = vshll.u32 %v297, 16
      %v354 = vor.u32 %v351, %v352
      %v356 = vshrl.u32 %v298, 16
      %v358 = vrot.slane %v356, 7
      %v359 = vshll.u32 %v298, 16
      %v361 = vor.u32 %v358, %v359
      %vm371 = vcmask 1040384
      %vm372 = vsmask.f32 256
      %vm373 = vmand %vm371, %vm372
      %v374 = vsel %vm373, 0, %v305
      %v375 = vsel %vm373, 0, %v312
      %v376 = vsel %vm373, 0, %v319
      %v377 = vsel %vm373, 0, %v326
      %v378 = vsel %vm373, 0, %v333
      %v379 = vsel %vm373, 0, %v340
      %v380 = vsel %vm373, 0, %v347
      %v381 = vsel %vm373, 0, %v354
      %v382 = vsel %vm373, 0, %v361
      %vm383 = vcmask 1044480
      %vm384 = vsmask.f32 4352
      %vm385 = vmand %vm383, %vm384
      %v386 = vsel %vm385, %v374, 0
      %v387 = vsel %vm385, %v375, 0
      %v388 = vsel %vm385, %v376, 0
      %v389 = vsel %vm385, %v377, 0
      %v390 = vsel %vm385, %v378, 0
      %v391 = vsel %vm385, %v379, 0
      %v392 = vsel %vm385, %v380, 0
      %v393 = vsel %vm385, %v381, 0
      %v394 = vsel %vm385, %v382, 0
      %v395 = vld [vmem:[%s3] sm:$0xf]
      %v396 = vld [vmem:[%s3 + $0x4] sm:$0xf]
      %v397 = vld [vmem:[%s3 + $0x8] sm:$0xf]
      %v398 = vld [vmem:[%s3 + $0xc] sm:$0xf]
      %v399 = vld [vmem:[%s3 + $0x10] sm:$0xf]
      %v400 = vld [vmem:[%s3 + $0x14] sm:$0xf]
      %v401 = vld [vmem:[%s3 + $0x18] sm:$0xf]
      %v402 = vld [vmem:[%s3 + $0x1c] sm:$0xf]
      %v403 = vld [vmem:[%s3 + $0x20] sm:$0xf]
      %v404 = vld [vmem:[%s3 + $0x24] sm:$0xf]
      %v405 = vld [vmem:[%s3 + $0x28] sm:$0xf]
      %v406 = vld [vmem:[%s3 + $0x2c] sm:$0xf]
      %v407 = vld [vmem:[%s3 + $0x30] sm:$0xf]
      %v408 = vld [vmem:[%s3 + $0x34] sm:$0xf]
      %v409 = vld [vmem:[%s3 + $0x38] sm:$0xf]
      %v410 = vld [vmem:[%s3 + $0x3c] sm:$0xf]
      %v411 = vld [vmem:[%s3 + $0x40] sm:$0xf]
      %v412 = vld [vmem:[%s3 + $0x44] sm:$0xf]
      %v413 = vld [vmem:[%s3 + $0x48] sm:$0xf]
      %v414 = vld [vmem:[%s3 + $0x4c] sm:$0xf]
      %v415 = vld [vmem:[%s3 + $0x50] sm:$0xf]
      %v416 = vld [vmem:[%s3 + $0x54] sm:$0xf]
      %v417 = vld [vmem:[%s3 + $0x58] sm:$0xf]
      %v418 = vld [vmem:[%s3 + $0x5c] sm:$0xf]
      %v419 = vld [vmem:[%s3 + $0x60] sm:$0xf]
      %v420 = vld [vmem:[%s3 + $0x64] sm:$0xf]
      %v421 = vld [vmem:[%s3 + $0x68] sm:$0xf]
      %v422 = vld [vmem:[%s3 + $0x6c] sm:$0xf]
      %v423 = vld [vmem:[%s3 + $0x70] sm:$0xf]
      %v424 = vld [vmem:[%s3 + $0x74] sm:$0xf]
      %v425 = vld [vmem:[%s3 + $0x78] sm:$0xf]
      %v426 = vld [vmem:[%s3 + $0x7c] sm:$0xf]
      %v427 = vld [vmem:[%s3 + $0x80] sm:$0xf]
      %v428 = vld [vmem:[%s3 + $0x84] sm:$0xf]
      %v429 = vld [vmem:[%s3 + $0x88] sm:$0xf]
      %v430 = vld [vmem:[%s3 + $0x8c] sm:$0xf]
      %v431 = vld [vmem:[%s3 + $0x90] sm:$0xf]
      %v432 = vld [vmem:[%s3 + $0x94] sm:$0xf]
      %v433 = vld [vmem:[%s3 + $0x98] sm:$0xf]
      %v434 = vld [vmem:[%s3 + $0x9c] sm:$0xf]
      %v435 = vld [vmem:[%s3 + $0xa0] sm:$0xf]
      %v436 = vld [vmem:[%s3 + $0xa4] sm:$0xf]
      %v437 = vld [vmem:[%s3 + $0xa8] sm:$0xf]
      %v438 = vld [vmem:[%s3 + $0xac] sm:$0xf]
      %v439 = vld [vmem:[%s3 + $0xb0] sm:$0xf]
      %v440 = vld [vmem:[%s3 + $0xb4] sm:$0xf]
      %v441 = vld [vmem:[%s3 + $0xb8] sm:$0xf]
      %v442 = vld [vmem:[%s3 + $0xbc] sm:$0xf]
      %v443 = vld [vmem:[%s3 + $0xc0] sm:$0xf]
      %v444 = vld [vmem:[%s3 + $0xc4] sm:$0xf]
      %v445 = vld [vmem:[%s3 + $0xc8] sm:$0xf]
      %v446 = vld [vmem:[%s3 + $0xcc] sm:$0xf]
      %v447 = vld [vmem:[%s3 + $0xd0] sm:$0xf]
      %v448 = vld [vmem:[%s3 + $0xd4] sm:$0xf]
      %v449 = vld [vmem:[%s3 + $0xd8] sm:$0xf]
      %v450 = vld [vmem:[%s3 + $0xdc] sm:$0xf]
      %v451 = vld [vmem:[%s3 + $0xe0] sm:$0xf]
      %v452 = vld [vmem:[%s3 + $0xe4] sm:$0xf]
      %v453 = vld [vmem:[%s3 + $0xe8] sm:$0xf]
      %v454 = vld [vmem:[%s3 + $0xec] sm:$0xf]
      %v455 = vld [vmem:[%s3 + $0xf0] sm:$0xf]
      %v456 = vld [vmem:[%s3 + $0xf4] sm:$0xf]
      %v457 = vld [vmem:[%s3 + $0xf8] sm:$0xf]
      %v458 = vld [vmem:[%s3 + $0xfc] sm:$0xf]
      %v459 = vld [vmem:[%s3 + $0x100] sm:$0xf]
      %v460 = vld [vmem:[%s3 + $0x104] sm:$0xf]
      %v461 = vld [vmem:[%s3 + $0x108] sm:$0xf]
      %v462 = vld [vmem:[%s3 + $0x10c] sm:$0xf]
      %v463 = vld [vmem:[%s3 + $0x110] sm:$0xf]
      %v464 = vld [vmem:[%s3 + $0x114] sm:$0xf]
      %v465 = vld [vmem:[%s3 + $0x118] sm:$0xf]
      %v466 = vld [vmem:[%s3 + $0x11c] sm:$0xf]
      %v467 = vld [vmem:[%s3 + $0x120] sm:$0xf]
      %v468 = vld [vmem:[%s3 + $0x124] sm:$0xf]
      %v469 = vld [vmem:[%s3 + $0x128] sm:$0xf]
      %v470 = vld [vmem:[%s3 + $0x12c] sm:$0xf]
      %v471 = vld [vmem:[%s3 + $0x130] sm:$0xf]
      %v472 = vld [vmem:[%s3 + $0x134] sm:$0xf]
      %v473 = vld [vmem:[%s3 + $0x138] sm:$0xf]
      %v474 = vld [vmem:[%s3 + $0x13c] sm:$0xf]
      %v475 = vld [vmem:[%s3 + $0x140] sm:$0xf]
      %v476 = vld [vmem:[%s3 + $0x144] sm:$0xf]
      %v477 = vld [vmem:[%s3 + $0x148] sm:$0xf]
      %v478 = vld [vmem:[%s3 + $0x14c] sm:$0xf]
      %v479 = vld [vmem:[%s3 + $0x150] sm:$0xf]
      %v480 = vld [vmem:[%s3 + $0x154] sm:$0xf]
      %v481 = vld [vmem:[%s3 + $0x158] sm:$0xf]
      %v482 = vld [vmem:[%s3 + $0x15c] sm:$0xf]
      %v483 = vld [vmem:[%s3 + $0x160] sm:$0xf]
      %v484 = vld [vmem:[%s3 + $0x164] sm:$0xf]
      %v485 = vld [vmem:[%s3 + $0x168] sm:$0xf]
      %v486 = vld [vmem:[%s3 + $0x16c] sm:$0xf]
      %v487 = vld [vmem:[%s3 + $0x170] sm:$0xf]
      %v488 = vld [vmem:[%s3 + $0x174] sm:$0xf]
      %v489 = vld [vmem:[%s3 + $0x178] sm:$0xf]
      %v490 = vld [vmem:[%s3 + $0x17c] sm:$0xf]
      %v491 = vld [vmem:[%s3 + $0x180] sm:$0xf]
      %v492 = vld [vmem:[%s3 + $0x184] sm:$0xf]
      %v493 = vld [vmem:[%s3 + $0x188] sm:$0xf]
      %v494 = vld [vmem:[%s3 + $0x18c] sm:$0xf]
      %v495 = vld [vmem:[%s3 + $0x190] sm:$0xf]
      %v496 = vld [vmem:[%s3 + $0x194] sm:$0xf]
      %v497 = vld [vmem:[%s3 + $0x198] sm:$0xf]
      %v498 = vld [vmem:[%s3 + $0x19c] sm:$0xf]
      %v499 = vld [vmem:[%s3 + $0x1a0] sm:$0xf]
      %v500 = vld [vmem:[%s3 + $0x1a4] sm:$0xf]
      %v501 = vld [vmem:[%s3 + $0x1a8] sm:$0xf]
      %v502 = vld [vmem:[%s3 + $0x1ac] sm:$0xf]
      %v503 = vld [vmem:[%s3 + $0x1b0] sm:$0xf]
      %v504 = vld [vmem:[%s3 + $0x1b4] sm:$0xf]
      %v505 = vld [vmem:[%s3 + $0x1b8] sm:$0xf]
      %v506 = vld [vmem:[%s3 + $0x1bc] sm:$0xf]
      %v507 = vld [vmem:[%s3 + $0x1c0] sm:$0xf]
      %v508 = vld [vmem:[%s3 + $0x1c4] sm:$0xf]
      %v509 = vld [vmem:[%s3 + $0x1c8] sm:$0xf]
      %v510 = vld [vmem:[%s3 + $0x1cc] sm:$0xf]
      %v511 = vld [vmem:[%s3 + $0x1d0] sm:$0xf]
      %v512 = vld [vmem:[%s3 + $0x1d4] sm:$0xf]
      %v513 = vld [vmem:[%s3 + $0x1d8] sm:$0xf]
      %v514 = vld [vmem:[%s3 + $0x1dc] sm:$0xf]
      %v515 = vld [vmem:[%s3 + $0x1e0] sm:$0xf]
      %v516 = vld [vmem:[%s3 + $0x1e4] sm:$0xf]
      %v517 = vld [vmem:[%s3 + $0x1e8] sm:$0xf]
      %v518 = vld [vmem:[%s3 + $0x1ec] sm:$0xf]
      %v519 = vld [vmem:[%s3 + $0x1f0] sm:$0xf]
      %v520 = vld [vmem:[%s3 + $0x1f4] sm:$0xf]
      %v521 = vld [vmem:[%s3 + $0x1f8] sm:$0xf]
      %v522 = vld [vmem:[%s3 + $0x1fc] sm:$0xf]
      %v523 = vld [vmem:[%s3 + $0x200] sm:$0xf]
      %v524 = vld [vmem:[%s3 + $0x204] sm:$0xf]
      %v525 = vld [vmem:[%s3 + $0x208] sm:$0xf]
      %v526 = vld [vmem:[%s3 + $0x20c] sm:$0xf]
      %v527 = vld [vmem:[%s3 + $0x210] sm:$0xf]
      %v528 = vld [vmem:[%s3 + $0x214] sm:$0xf]
      %v529 = vld [vmem:[%s3 + $0x218] sm:$0xf]
      %v530 = vld [vmem:[%s3 + $0x21c] sm:$0xf]
      %v531 = vld [vmem:[%s3 + $0x220] sm:$0xf]
      %v532 = vld [vmem:[%s3 + $0x224] sm:$0xf]
      %v533 = vld [vmem:[%s3 + $0x228] sm:$0xf]
      %v534 = vld [vmem:[%s3 + $0x22c] sm:$0xf]
      %v535 = vld [vmem:[%s3 + $0x230] sm:$0xf]
      %v536 = vld [vmem:[%s3 + $0x234] sm:$0xf]
      %v537 = vld [vmem:[%s3 + $0x238] sm:$0xf]
      %v538 = vld [vmem:[%s3 + $0x23c] sm:$0xf]
      %v540 = vshrl.u32 %v386, 16
      %v542 = vshll.u32 %v386, 16
      %v544 = vrot.slane %v542, 1
      %v545 = vor.u32 %v540, %v544
      %v547 = vshrl.u32 %v387, 16
      %v549 = vshll.u32 %v387, 16
      %v551 = vrot.slane %v549, 1
      %v552 = vor.u32 %v547, %v551
      %v554 = vshrl.u32 %v388, 16
      %v556 = vshll.u32 %v388, 16
      %v558 = vrot.slane %v556, 1
      %v559 = vor.u32 %v554, %v558
      %v561 = vshrl.u32 %v389, 16
      %v563 = vshll.u32 %v389, 16
      %v565 = vrot.slane %v563, 1
      %v566 = vor.u32 %v561, %v565
      %v568 = vshrl.u32 %v390, 16
      %v570 = vshll.u32 %v390, 16
      %v572 = vrot.slane %v570, 1
      %v573 = vor.u32 %v568, %v572
      %v575 = vshrl.u32 %v391, 16
      %v577 = vshll.u32 %v391, 16
      %v579 = vrot.slane %v577, 1
      %v580 = vor.u32 %v575, %v579
      %v582 = vshrl.u32 %v392, 16
      %v584 = vshll.u32 %v392, 16
      %v586 = vrot.slane %v584, 1
      %v587 = vor.u32 %v582, %v586
      %v589 = vshrl.u32 %v393, 16
      %v591 = vshll.u32 %v393, 16
      %v593 = vrot.slane %v591, 1
      %v594 = vor.u32 %v589, %v593
      %v603 = vrot.slane %v386, 1
      %v604 = vrot.slane %v387, 1
      %v605 = vrot.slane %v388, 1
      %v606 = vrot.slane %v389, 1
      %v607 = vrot.slane %v390, 1
      %v608 = vrot.slane %v391, 1
      %v609 = vrot.slane %v392, 1
      %v610 = vrot.slane %v393, 1
      %v612 = vshrl.u32 %v394, 16
      %v614 = vshll.u32 %v394, 16
      %v616 = vrot.slane %v614, 1
      %v617 = vor.u32 %v612, %v616
      %v619 = vrot.slane %v394, 1
      %v620 = vunpack.c.l.b16 %v386
      %v621 = vunpack.c.l.b16 %v545
      %v622 = vunpack.c.l.b16 %v603
      %v623 = vunpack.c.l.b16 %v387
      %v624 = vunpack.c.l.b16 %v552
      %v625 = vunpack.c.l.b16 %v604
      %v626 = vunpack.c.l.b16 %v388
      %v627 = vunpack.c.l.b16 %v559
      %v628 = vunpack.c.l.b16 %v605
      %v629 = vunpack.c.l.b16 %v389
      %v630 = vunpack.c.l.b16 %v566
      %v631 = vunpack.c.l.b16 %v606
      %v632 = vunpack.c.l.b16 %v390
      %v633 = vunpack.c.l.b16 %v573
      %v634 = vunpack.c.l.b16 %v607
      %v635 = vunpack.c.l.b16 %v391
      %v636 = vunpack.c.l.b16 %v580
      %v637 = vunpack.c.l.b16 %v608
      %v638 = vunpack.c.l.b16 %v392
      %v639 = vunpack.c.l.b16 %v587
      %v640 = vunpack.c.l.b16 %v609
      %v641 = vunpack.c.l.b16 %v393
      %v642 = vunpack.c.l.b16 %v594
      %v643 = vunpack.c.l.b16 %v610
      %v644 = vunpack.c.l.b16 %v394
      %v645 = vunpack.c.l.b16 %v617
      %v646 = vunpack.c.l.b16 %v619
      %v647 = vpack.c.b16 %v623, %v620
      %v648 = vpack.c.b16 %v624, %v621
      %v649 = vpack.c.b16 %v625, %v622
      %v650 = vpack.c.b16 %v626, %v623
      %v651 = vpack.c.b16 %v627, %v624
      %v652 = vpack.c.b16 %v628, %v625
      %v653 = vpack.c.b16 %v629, %v626
      %v654 = vpack.c.b16 %v630, %v627
      %v655 = vpack.c.b16 %v631, %v628
      %v656 = vpack.c.b16 %v632, %v629
      %v657 = vpack.c.b16 %v633, %v630
      %v658 = vpack.c.b16 %v634, %v631
      %v659 = vpack.c.b16 %v635, %v632
      %v660 = vpack.c.b16 %v636, %v633
      %v661 = vpack.c.b16 %v637, %v634
      %v662 = vpack.c.b16 %v638, %v635
      %v663 = vpack.c.b16 %v639, %v636
      %v664 = vpack.c.b16 %v640, %v637
      %v665 = vpack.c.b16 %v641, %v638
      %v666 = vpack.c.b16 %v642, %v639
      %v667 = vpack.c.b16 %v643, %v640
      %v668 = vpack.c.b16 %v644, %v641
      %v669 = vpack.c.b16 %v645, %v642
      %v670 = vpack.c.b16 %v646, %v643
      %v671 = vpack.c.b16 %v620, %v644
      %v672 = vpack.c.b16 %v621, %v645
      %v673 = vpack.c.b16 %v622, %v646
      %v845 = vunpack.c.l.b16 %v395
      %v846 = vunpack.c.l.b16 %v396
      %v847 = vunpack.c.l.b16 %v397
      %v848 = vunpack.c.l.b16 %v398
      %v849 = vunpack.c.l.b16 %v399
      %v850 = vunpack.c.l.b16 %v400
      %v851 = vunpack.c.l.b16 %v401
      %v852 = vunpack.c.l.b16 %v402
      %v853 = vunpack.c.l.b16 %v403
      %v854 = vunpack.c.l.b16 %v404
      %v855 = vunpack.c.l.b16 %v405
      %v856 = vunpack.c.l.b16 %v406
      %v857 = vunpack.c.l.b16 %v407
      %v858 = vunpack.c.l.b16 %v408
      %v859 = vunpack.c.l.b16 %v409
      %v860 = vunpack.c.l.b16 %v410
      %v861 = vunpack.c.l.b16 %v411
      %v862 = vunpack.c.l.b16 %v412
      %v863 = vunpack.c.l.b16 %v413
      %v864 = vunpack.c.l.b16 %v414
      %v865 = vunpack.c.l.b16 %v415
      %v866 = vunpack.c.l.b16 %v416
      %v867 = vunpack.c.l.b16 %v417
      %v868 = vunpack.c.l.b16 %v418
      %v869 = vunpack.c.l.b16 %v419
      %v870 = vunpack.c.l.b16 %v420
      %v871 = vunpack.c.l.b16 %v421
      %v872 = vunpack.c.l.b16 %v422
      %v873 = vunpack.c.l.b16 %v423
      %v874 = vunpack.c.l.b16 %v424
      %v875 = vunpack.c.l.b16 %v425
      %v876 = vunpack.c.l.b16 %v426
      %v877 = vunpack.c.l.b16 %v427
      %v878 = vunpack.c.l.b16 %v428
      %v879 = vunpack.c.l.b16 %v429
      %v880 = vunpack.c.l.b16 %v430
      %v881 = vunpack.c.l.b16 %v431
      %v882 = vunpack.c.l.b16 %v432
      %v883 = vunpack.c.l.b16 %v433
      %v884 = vunpack.c.l.b16 %v434
      %v885 = vunpack.c.l.b16 %v435
      %v886 = vunpack.c.l.b16 %v436
      %v887 = vunpack.c.l.b16 %v437
      %v888 = vunpack.c.l.b16 %v438
      %v889 = vunpack.c.l.b16 %v439
      %v890 = vunpack.c.l.b16 %v440
      %v891 = vunpack.c.l.b16 %v441
      %v892 = vunpack.c.l.b16 %v442
      %v893 = vunpack.c.l.b16 %v443
      %v894 = vunpack.c.l.b16 %v444
      %v895 = vunpack.c.l.b16 %v445
      %v896 = vunpack.c.l.b16 %v446
      %v897 = vunpack.c.l.b16 %v447
      %v898 = vunpack.c.l.b16 %v448
      %v899 = vunpack.c.l.b16 %v449
      %v900 = vunpack.c.l.b16 %v450
      %v901 = vunpack.c.l.b16 %v451
      %v902 = vunpack.c.l.b16 %v452
      %v903 = vunpack.c.l.b16 %v453
      %v904 = vunpack.c.l.b16 %v454
      %v905 = vunpack.c.l.b16 %v455
      %v906 = vunpack.c.l.b16 %v456
      %v907 = vunpack.c.l.b16 %v457
      %v908 = vunpack.c.l.b16 %v458
      %v909 = vunpack.c.l.b16 %v459
      %v910 = vunpack.c.l.b16 %v460
      %v911 = vunpack.c.l.b16 %v461
      %v912 = vunpack.c.l.b16 %v462
      %v913 = vunpack.c.l.b16 %v463
      %v914 = vunpack.c.l.b16 %v464
      %v915 = vunpack.c.l.b16 %v465
      %v916 = vunpack.c.l.b16 %v466
      %v917 = vunpack.c.l.b16 %v467
      %v918 = vunpack.c.l.b16 %v468
      %v919 = vunpack.c.l.b16 %v469
      %v920 = vunpack.c.l.b16 %v470
      %v921 = vunpack.c.l.b16 %v471
      %v922 = vunpack.c.l.b16 %v472
      %v923 = vunpack.c.l.b16 %v473
      %v924 = vunpack.c.l.b16 %v474
      %v925 = vunpack.c.l.b16 %v475
      %v926 = vunpack.c.l.b16 %v476
      %v927 = vunpack.c.l.b16 %v477
      %v928 = vunpack.c.l.b16 %v478
      %v929 = vunpack.c.l.b16 %v479
      %v930 = vunpack.c.l.b16 %v480
      %v931 = vunpack.c.l.b16 %v481
      %v932 = vunpack.c.l.b16 %v482
      %v933 = vunpack.c.l.b16 %v483
      %v934 = vunpack.c.l.b16 %v484
      %v935 = vunpack.c.l.b16 %v485
      %v936 = vunpack.c.l.b16 %v486
      %v937 = vunpack.c.l.b16 %v487
      %v938 = vunpack.c.l.b16 %v488
      %v939 = vunpack.c.l.b16 %v489
      %v940 = vunpack.c.l.b16 %v490
      %v941 = vunpack.c.l.b16 %v491
      %v942 = vunpack.c.l.b16 %v492
      %v943 = vunpack.c.l.b16 %v493
      %v944 = vunpack.c.l.b16 %v494
      %v945 = vunpack.c.l.b16 %v495
      %v946 = vunpack.c.l.b16 %v496
      %v947 = vunpack.c.l.b16 %v497
      %v948 = vunpack.c.l.b16 %v498
      %v949 = vunpack.c.l.b16 %v499
      %v950 = vunpack.c.l.b16 %v500
      %v951 = vunpack.c.l.b16 %v501
      %v952 = vunpack.c.l.b16 %v502
      %v953 = vunpack.c.l.b16 %v503
      %v954 = vunpack.c.l.b16 %v504
      %v955 = vunpack.c.l.b16 %v505
      %v956 = vunpack.c.l.b16 %v506
      %v957 = vunpack.c.l.b16 %v507
      %v958 = vunpack.c.l.b16 %v508
      %v959 = vunpack.c.l.b16 %v509
      %v960 = vunpack.c.l.b16 %v510
      %v961 = vunpack.c.l.b16 %v511
      %v962 = vunpack.c.l.b16 %v512
      %v963 = vunpack.c.l.b16 %v513
      %v964 = vunpack.c.l.b16 %v514
      %v965 = vunpack.c.l.b16 %v515
      %v966 = vunpack.c.l.b16 %v516
      %v967 = vunpack.c.l.b16 %v517
      %v968 = vunpack.c.l.b16 %v518
      %v969 = vunpack.c.l.b16 %v519
      %v970 = vunpack.c.l.b16 %v520
      %v971 = vunpack.c.l.b16 %v521
      %v972 = vunpack.c.l.b16 %v522
      %v973 = vunpack.c.l.b16 %v523
      %v974 = vunpack.c.l.b16 %v524
      %v975 = vunpack.c.l.b16 %v525
      %v976 = vunpack.c.l.b16 %v526
      %v977 = vunpack.c.l.b16 %v527
      %v978 = vunpack.c.l.b16 %v528
      %v979 = vunpack.c.l.b16 %v529
      %v980 = vunpack.c.l.b16 %v530
      %v981 = vunpack.c.l.b16 %v531
      %v982 = vunpack.c.l.b16 %v532
      %v983 = vunpack.c.l.b16 %v533
      %v984 = vunpack.c.l.b16 %v534
      %v985 = vunpack.c.l.b16 %v535
      %v986 = vunpack.c.l.b16 %v536
      %v987 = vunpack.c.l.b16 %v537
      %v988 = vunpack.c.l.b16 %v538
      %v989 = vpack.c.b16 %v846, %v845
      %v990 = vpack.c.b16 %v848, %v847
      %v991 = vpack.c.b16 %v850, %v849
      %v992 = vpack.c.b16 %v852, %v851
      %v993 = vpack.c.b16 %v854, %v853
      %v994 = vpack.c.b16 %v856, %v855
      %v995 = vpack.c.b16 %v858, %v857
      %v996 = vpack.c.b16 %v860, %v859
      %v997 = vpack.c.b16 %v862, %v861
      %v998 = vpack.c.b16 %v864, %v863
      %v999 = vpack.c.b16 %v866, %v865
      %v1000 = vpack.c.b16 %v868, %v867
      %v1001 = vpack.c.b16 %v870, %v869
      %v1002 = vpack.c.b16 %v872, %v871
      %v1003 = vpack.c.b16 %v874, %v873
      %v1004 = vpack.c.b16 %v876, %v875
      %v1005 = vpack.c.b16 %v878, %v877
      %v1006 = vpack.c.b16 %v880, %v879
      %v1007 = vpack.c.b16 %v882, %v881
      %v1008 = vpack.c.b16 %v884, %v883
      %v1009 = vpack.c.b16 %v886, %v885
      %v1010 = vpack.c.b16 %v888, %v887
      %v1011 = vpack.c.b16 %v890, %v889
      %v1012 = vpack.c.b16 %v892, %v891
      %v1013 = vpack.c.b16 %v894, %v893
      %v1014 = vpack.c.b16 %v896, %v895
      %v1015 = vpack.c.b16 %v898, %v897
      %v1016 = vpack.c.b16 %v900, %v899
      %v1017 = vpack.c.b16 %v902, %v901
      %v1018 = vpack.c.b16 %v904, %v903
      %v1019 = vpack.c.b16 %v906, %v905
      %v1020 = vpack.c.b16 %v908, %v907
      %v1021 = vpack.c.b16 %v910, %v909
      %v1022 = vpack.c.b16 %v912, %v911
      %v1023 = vpack.c.b16 %v914, %v913
      %v1024 = vpack.c.b16 %v916, %v915
      %v1025 = vpack.c.b16 %v918, %v917
      %v1026 = vpack.c.b16 %v920, %v919
      %v1027 = vpack.c.b16 %v922, %v921
      %v1028 = vpack.c.b16 %v924, %v923
      %v1029 = vpack.c.b16 %v926, %v925
      %v1030 = vpack.c.b16 %v928, %v927
      %v1031 = vpack.c.b16 %v930, %v929
      %v1032 = vpack.c.b16 %v932, %v931
      %v1033 = vpack.c.b16 %v934, %v933
      %v1034 = vpack.c.b16 %v936, %v935
      %v1035 = vpack.c.b16 %v938, %v937
      %v1036 = vpack.c.b16 %v940, %v939
      %v1037 = vpack.c.b16 %v942, %v941
      %v1038 = vpack.c.b16 %v944, %v943
      %v1039 = vpack.c.b16 %v946, %v945
      %v1040 = vpack.c.b16 %v948, %v947
      %v1041 = vpack.c.b16 %v950, %v949
      %v1042 = vpack.c.b16 %v952, %v951
      %v1043 = vpack.c.b16 %v954, %v953
      %v1044 = vpack.c.b16 %v956, %v955
      %v1045 = vpack.c.b16 %v958, %v957
      %v1046 = vpack.c.b16 %v960, %v959
      %v1047 = vpack.c.b16 %v962, %v961
      %v1048 = vpack.c.b16 %v964, %v963
      %v1049 = vpack.c.b16 %v966, %v965
      %v1050 = vpack.c.b16 %v968, %v967
      %v1051 = vpack.c.b16 %v970, %v969
      %v1052 = vpack.c.b16 %v972, %v971
      %v1053 = vpack.c.b16 %v974, %v973
      %v1054 = vpack.c.b16 %v976, %v975
      %v1055 = vpack.c.b16 %v978, %v977
      %v1056 = vpack.c.b16 %v980, %v979
      %v1057 = vpack.c.b16 %v982, %v981
      %v1058 = vpack.c.b16 %v984, %v983
      %v1059 = vpack.c.b16 %v986, %v985
      %v1060 = vpack.c.b16 %v988, %v987
      %1133 = vmatprep.subr.bf16.mxu0 0
      %1134 = vmatpush1.bf16.msra.mxu0 %v996
      %1135 = vmatprep.subr.bf16.mxu0 0
      %1136 = vmatpush1.bf16.msra.mxu0 %v995
      %1137 = vmatprep.subr.bf16.mxu0 0
      %1138 = vmatpush1.bf16.msra.mxu0 %v994
      %1139 = vmatprep.subr.bf16.mxu0 0
      %1140 = vmatpush1.bf16.msra.mxu0 %v993
      %1141 = vmatprep.subr.bf16.mxu0 0
      %1142 = vmatpush1.bf16.msra.mxu0 %v992
      %1143 = vmatprep.subr.bf16.mxu0 0
      %1144 = vmatpush1.bf16.msra.mxu0 %v991
      %1145 = vmatprep.subr.bf16.mxu0 0
      %1146 = vmatpush1.bf16.msra.mxu0 %v990
      %1147 = vmatprep.subr.bf16.mxu0 0
      %1148 = vmatpush1.bf16.msra.mxu0 %v989
      %1149 = vmatprep.subr.bf16.mxu0 0
      %1150 = vmatpush2.bf16.msra.mxu0 %v1004
      %1151 = vmatprep.subr.bf16.mxu0 0
      %1152 = vmatpush2.bf16.msra.mxu0 %v1003
      %1153 = vmatprep.subr.bf16.mxu0 0
      %1154 = vmatpush2.bf16.msra.mxu0 %v1002
      %1155 = vmatprep.subr.bf16.mxu0 0
      %1156 = vmatpush2.bf16.msra.mxu0 %v1001
      %1157 = vmatprep.subr.bf16.mxu0 0
      %1158 = vmatpush2.bf16.msra.mxu0 %v1000
      %1159 = vmatprep.subr.bf16.mxu0 0
      %1160 = vmatpush2.bf16.msra.mxu0 %v999
      %1161 = vmatprep.subr.bf16.mxu0 0
      %1162 = vmatpush2.bf16.msra.mxu0 %v998
      %1163 = vmatprep.subr.bf16.mxu0 0
      %1164 = vmatpush2.bf16.msra.mxu0 %v997
      %1165 = vmatprep.mubr.bf16.mxu0 %v648
      %1166 = vmatmul.mubr.bf16.gmra.mxu0 %v647
      %v1167 = vpop.f32.mrf.mxu0
      %v1168 = vadd.f32 0.0, %v1167
      %v1169 = vpop.f32.mrf.mxu0
      %v1170 = vpop.f32.mrf.mxu0
      %v1171 = vadd.f32 0.0, %v1170
      %v1172 = vpop.f32.mrf.mxu0
      %1173 = vmatprep.mubr.bf16.mxu0 %v654
      %1174 = vmatmul.mubr.bf16.gmra.mxu0 %v653
      %v1175 = vpop.f32.mrf.mxu0
      %v1176 = vadd.f32 0.0, %v1175
      %v1177 = vpop.f32.mrf.mxu0
      %v1178 = vpop.f32.mrf.mxu0
      %v1179 = vadd.f32 0.0, %v1178
      %v1180 = vpop.f32.mrf.mxu0
      %1181 = vmatprep.mubr.bf16.mxu0 %v660
      %1182 = vmatmul.mubr.bf16.gmra.mxu0 %v659
      %v1183 = vpop.f32.mrf.mxu0
      %v1184 = vadd.f32 0.0, %v1183
      %v1185 = vpop.f32.mrf.mxu0
      %v1186 = vpop.f32.mrf.mxu0
      %v1187 = vadd.f32 0.0, %v1186
      %v1188 = vpop.f32.mrf.mxu0
      %1189 = vmatprep.mubr.bf16.mxu0 %v666
      %1190 = vmatmul.mubr.bf16.gmra.mxu0 %v665
      %v1191 = vpop.f32.mrf.mxu0
      %v1192 = vadd.f32 0.0, %v1191
      %v1193 = vpop.f32.mrf.mxu0
      %v1194 = vpop.f32.mrf.mxu0
      %v1195 = vadd.f32 0.0, %v1194
      %v1196 = vpop.f32.mrf.mxu0
      %1197 = vdwg.mxu0
      %1198 = vmatprep.subr.bf16.mxu0 0
      %1199 = vmatpush1.bf16.msra.mxu0 %v1012
      %1200 = vmatprep.subr.bf16.mxu0 0
      %1201 = vmatpush1.bf16.msra.mxu0 %v1011
      %1202 = vmatprep.subr.bf16.mxu0 0
      %1203 = vmatpush1.bf16.msra.mxu0 %v1010
      %1204 = vmatprep.subr.bf16.mxu0 0
      %1205 = vmatpush1.bf16.msra.mxu0 %v1009
      %1206 = vmatprep.subr.bf16.mxu0 0
      %1207 = vmatpush1.bf16.msra.mxu0 %v1008
      %1208 = vmatprep.subr.bf16.mxu0 0
      %1209 = vmatpush1.bf16.msra.mxu0 %v1007
      %1210 = vmatprep.subr.bf16.mxu0 0
      %1211 = vmatpush1.bf16.msra.mxu0 %v1006
      %1212 = vmatprep.subr.bf16.mxu0 0
      %1213 = vmatpush1.bf16.msra.mxu0 %v1005
      %1214 = vmatprep.subr.bf16.mxu0 0
      %1215 = vmatpush2.bf16.msra.mxu0 %v1020
      %1216 = vmatprep.subr.bf16.mxu0 0
      %1217 = vmatpush2.bf16.msra.mxu0 %v1019
      %1218 = vmatprep.subr.bf16.mxu0 0
      %1219 = vmatpush2.bf16.msra.mxu0 %v1018
      %1220 = vmatprep.subr.bf16.mxu0 0
      %1221 = vmatpush2.bf16.msra.mxu0 %v1017
      %1222 = vmatprep.subr.bf16.mxu0 0
      %1223 = vmatpush2.bf16.msra.mxu0 %v1016
      %1224 = vmatprep.subr.bf16.mxu0 0
      %1225 = vmatpush2.bf16.msra.mxu0 %v1015
      %1226 = vmatprep.subr.bf16.mxu0 0
      %1227 = vmatpush2.bf16.msra.mxu0 %v1014
      %1228 = vmatprep.subr.bf16.mxu0 0
      %1229 = vmatpush2.bf16.msra.mxu0 %v1013
      %1230 = vmatprep.mubr.bf16.mxu0 %v650
      %1231 = vmatmul.mubr.bf16.gmra.mxu0 %v649
      %v1232 = vpop.f32.mrf.mxu0
      %v1233 = vadd.f32 %v1168, %v1232
      %v1234 = vpop.f32.mrf.mxu0
      %v1235 = vpop.f32.mrf.mxu0
      %v1236 = vadd.f32 %v1171, %v1235
      %v1237 = vpop.f32.mrf.mxu0
      %1238 = vmatprep.mubr.bf16.mxu0 %v656
      %1239 = vmatmul.mubr.bf16.gmra.mxu0 %v655
      %v1240 = vpop.f32.mrf.mxu0
      %v1241 = vadd.f32 %v1176, %v1240
      %v1242 = vpop.f32.mrf.mxu0
      %v1243 = vpop.f32.mrf.mxu0
      %v1244 = vadd.f32 %v1179, %v1243
      %v1245 = vpop.f32.mrf.mxu0
      %1246 = vmatprep.mubr.bf16.mxu0 %v662
      %1247 = vmatmul.mubr.bf16.gmra.mxu0 %v661
      %v1248 = vpop.f32.mrf.mxu0
      %v1249 = vadd.f32 %v1184, %v1248
      %v1250 = vpop.f32.mrf.mxu0
      %v1251 = vpop.f32.mrf.mxu0
      %v1252 = vadd.f32 %v1187, %v1251
      %v1253 = vpop.f32.mrf.mxu0
      %1254 = vmatprep.mubr.bf16.mxu0 %v668
      %1255 = vmatmul.mubr.bf16.gmra.mxu0 %v667
      %v1256 = vpop.f32.mrf.mxu0
      %v1257 = vadd.f32 %v1192, %v1256
      %v1258 = vpop.f32.mrf.mxu0
      %v1259 = vpop.f32.mrf.mxu0
      %v1260 = vadd.f32 %v1195, %v1259
      %v1261 = vpop.f32.mrf.mxu0
      %1262 = vdwg.mxu0
      %1263 = vmatprep.subr.bf16.mxu0 0
      %1264 = vmatpush1.bf16.msra.mxu0 %v1028
      %1265 = vmatprep.subr.bf16.mxu0 0
      %1266 = vmatpush1.bf16.msra.mxu0 %v1027
      %1267 = vmatprep.subr.bf16.mxu0 0
      %1268 = vmatpush1.bf16.msra.mxu0 %v1026
      %1269 = vmatprep.subr.bf16.mxu0 0
      %1270 = vmatpush1.bf16.msra.mxu0 %v1025
      %1271 = vmatprep.subr.bf16.mxu0 0
      %1272 = vmatpush1.bf16.msra.mxu0 %v1024
      %1273 = vmatprep.subr.bf16.mxu0 0
      %1274 = vmatpush1.bf16.msra.mxu0 %v1023
      %1275 = vmatprep.subr.bf16.mxu0 0
      %1276 = vmatpush1.bf16.msra.mxu0 %v1022
      %1277 = vmatprep.subr.bf16.mxu0 0
      %1278 = vmatpush1.bf16.msra.mxu0 %v1021
      %1279 = vmatprep.subr.bf16.mxu0 0
      %1280 = vmatpush2.bf16.msra.mxu0 %v1036
      %1281 = vmatprep.subr.bf16.mxu0 0
      %1282 = vmatpush2.bf16.msra.mxu0 %v1035
      %1283 = vmatprep.subr.bf16.mxu0 0
      %1284 = vmatpush2.bf16.msra.mxu0 %v1034
      %1285 = vmatprep.subr.bf16.mxu0 0
      %1286 = vmatpush2.bf16.msra.mxu0 %v1033
      %1287 = vmatprep.subr.bf16.mxu0 0
      %1288 = vmatpush2.bf16.msra.mxu0 %v1032
      %1289 = vmatprep.subr.bf16.mxu0 0
      %1290 = vmatpush2.bf16.msra.mxu0 %v1031
      %1291 = vmatprep.subr.bf16.mxu0 0
      %1292 = vmatpush2.bf16.msra.mxu0 %v1030
      %1293 = vmatprep.subr.bf16.mxu0 0
      %1294 = vmatpush2.bf16.msra.mxu0 %v1029
      %1295 = vmatprep.mubr.bf16.mxu0 %v652
      %1296 = vmatmul.mubr.bf16.gmra.mxu0 %v651
      %v1297 = vpop.f32.mrf.mxu0
      %v1298 = vadd.f32 %v1233, %v1297
      %v1299 = vpop.f32.mrf.mxu0
      %v1300 = vpop.f32.mrf.mxu0
      %v1301 = vadd.f32 %v1236, %v1300
      %v1302 = vpop.f32.mrf.mxu0
      %1303 = vmatprep.mubr.bf16.mxu0 %v658
      %1304 = vmatmul.mubr.bf16.gmra.mxu0 %v657
      %v1305 = vpop.f32.mrf.mxu0
      %v1306 = vadd.f32 %v1241, %v1305
      %v1307 = vpop.f32.mrf.mxu0
      %v1308 = vpop.f32.mrf.mxu0
      %v1309 = vadd.f32 %v1244, %v1308
      %v1310 = vpop.f32.mrf.mxu0
      %1311 = vmatprep.mubr.bf16.mxu0 %v664
      %1312 = vmatmul.mubr.bf16.gmra.mxu0 %v663
      %v1313 = vpop.f32.mrf.mxu0
      %v1314 = vadd.f32 %v1249, %v1313
      %v1315 = vpop.f32.mrf.mxu0
      %v1316 = vpop.f32.mrf.mxu0
      %v1317 = vadd.f32 %v1252, %v1316
      %v1318 = vpop.f32.mrf.mxu0
      %1319 = vmatprep.mubr.bf16.mxu0 %v670
      %1320 = vmatmul.mubr.bf16.gmra.mxu0 %v669
      %v1321 = vpop.f32.mrf.mxu0
      %v1322 = vadd.f32 %v1257, %v1321
      %v1323 = vpop.f32.mrf.mxu0
      %v1324 = vpop.f32.mrf.mxu0
      %v1325 = vadd.f32 %v1260, %v1324
      %v1326 = vpop.f32.mrf.mxu0
      %1327 = vdwg.mxu0
      %1328 = vmatprep.subr.bf16.mxu0 0
      %1329 = vmatpush1.bf16.msra.mxu0 %v1044
      %1330 = vmatprep.subr.bf16.mxu0 0
      %1331 = vmatpush1.bf16.msra.mxu0 %v1043
      %1332 = vmatprep.subr.bf16.mxu0 0
      %1333 = vmatpush1.bf16.msra.mxu0 %v1042
      %1334 = vmatprep.subr.bf16.mxu0 0
      %1335 = vmatpush1.bf16.msra.mxu0 %v1041
      %1336 = vmatprep.subr.bf16.mxu0 0
      %1337 = vmatpush1.bf16.msra.mxu0 %v1040
      %1338 = vmatprep.subr.bf16.mxu0 0
      %1339 = vmatpush1.bf16.msra.mxu0 %v1039
      %1340 = vmatprep.subr.bf16.mxu0 0
      %1341 = vmatpush1.bf16.msra.mxu0 %v1038
      %1342 = vmatprep.subr.bf16.mxu0 0
      %1343 = vmatpush1.bf16.msra.mxu0 %v1037
      %1344 = vmatprep.subr.bf16.mxu0 0
      %1345 = vmatpush2.bf16.msra.mxu0 %v1052
      %1346 = vmatprep.subr.bf16.mxu0 0
      %1347 = vmatpush2.bf16.msra.mxu0 %v1051
      %1348 = vmatprep.subr.bf16.mxu0 0
      %1349 = vmatpush2.bf16.msra.mxu0 %v1050
      %1350 = vmatprep.subr.bf16.mxu0 0
      %1351 = vmatpush2.bf16.msra.mxu0 %v1049
      %1352 = vmatprep.subr.bf16.mxu0 0
      %1353 = vmatpush2.bf16.msra.mxu0 %v1048
      %1354 = vmatprep.subr.bf16.mxu0 0
      %1355 = vmatpush2.bf16.msra.mxu0 %v1047
      %1356 = vmatprep.subr.bf16.mxu0 0
      %1357 = vmatpush2.bf16.msra.mxu0 %v1046
      %1358 = vmatprep.subr.bf16.mxu0 0
      %1359 = vmatpush2.bf16.msra.mxu0 %v1045
      %1360 = vmatprep.mubr.bf16.mxu0 %v654
      %1361 = vmatmul.mubr.bf16.gmra.mxu0 %v653
      %v1362 = vpop.f32.mrf.mxu0
      %v1363 = vadd.f32 %v1298, %v1362
      %v1364 = vpop.f32.mrf.mxu0
      %v1365 = vpop.f32.mrf.mxu0
      %v1366 = vadd.f32 %v1301, %v1365
      %v1367 = vpop.f32.mrf.mxu0
      %1368 = vmatprep.mubr.bf16.mxu0 %v660
      %1369 = vmatmul.mubr.bf16.gmra.mxu0 %v659
      %v1370 = vpop.f32.mrf.mxu0
      %v1371 = vadd.f32 %v1306, %v1370
      %v1372 = vpop.f32.mrf.mxu0
      %v1373 = vpop.f32.mrf.mxu0
      %v1374 = vadd.f32 %v1309, %v1373
      %v1375 = vpop.f32.mrf.mxu0
      %1376 = vmatprep.mubr.bf16.mxu0 %v666
      %1377 = vmatmul.mubr.bf16.gmra.mxu0 %v665
      %v1378 = vpop.f32.mrf.mxu0
      %v1379 = vadd.f32 %v1314, %v1378
      %v1380 = vpop.f32.mrf.mxu0
      %v1381 = vpop.f32.mrf.mxu0
      %v1382 = vadd.f32 %v1317, %v1381
      %v1383 = vpop.f32.mrf.mxu0
      %1384 = vmatprep.mubr.bf16.mxu0 %v672
      %1385 = vmatmul.mubr.bf16.gmra.mxu0 %v671
      %v1386 = vpop.f32.mrf.mxu0
      %v1387 = vadd.f32 %v1322, %v1386
      %v1388 = vpop.f32.mrf.mxu0
      %v1389 = vpop.f32.mrf.mxu0
      %v1390 = vadd.f32 %v1325, %v1389
      %v1391 = vpop.f32.mrf.mxu0
      %1392 = vdwg.mxu0
      %1393 = vmatprep.subr.bf16.mxu0 0
      %1394 = vmatpush1.bf16.msra.mxu0 %v1060
      %1395 = vmatprep.subr.bf16.mxu0 0
      %1396 = vmatpush1.bf16.msra.mxu0 %v1059
      %1397 = vmatprep.subr.bf16.mxu0 0
      %1398 = vmatpush1.bf16.msra.mxu0 %v1058
      %1399 = vmatprep.subr.bf16.mxu0 0
      %1400 = vmatpush1.bf16.msra.mxu0 %v1057
      %1401 = vmatprep.subr.bf16.mxu0 0
      %1402 = vmatpush1.bf16.msra.mxu0 %v1056
      %1403 = vmatprep.subr.bf16.mxu0 0
      %1404 = vmatpush1.bf16.msra.mxu0 %v1055
      %1405 = vmatprep.subr.bf16.mxu0 0
      %1406 = vmatpush1.bf16.msra.mxu0 %v1054
      %1407 = vmatprep.subr.bf16.mxu0 0
      %1408 = vmatpush1.bf16.msra.mxu0 %v1053
      %1409 = vmatprep.subr.bf16.mxu0 0
      %1410 = vmatpush2.bf16.msra.mxu0 0
      %1411 = vmatprep.subr.bf16.mxu0 0
      %1412 = vmatpush2.bf16.msra.mxu0 0
      %1413 = vmatprep.subr.bf16.mxu0 0
      %1414 = vmatpush2.bf16.msra.mxu0 0
      %1415 = vmatprep.subr.bf16.mxu0 0
      %1416 = vmatpush2.bf16.msra.mxu0 0
      %1417 = vmatprep.subr.bf16.mxu0 0
      %1418 = vmatpush2.bf16.msra.mxu0 0
      %1419 = vmatprep.subr.bf16.mxu0 0
      %1420 = vmatpush2.bf16.msra.mxu0 0
      %1421 = vmatprep.subr.bf16.mxu0 0
      %1422 = vmatpush2.bf16.msra.mxu0 0
      %1423 = vmatprep.subr.bf16.mxu0 0
      %1424 = vmatpush2.bf16.msra.mxu0 0
      %1425 = vmatprep.mubr.bf16.mxu0 0
      %1426 = vmatmul.mubr.bf16.gmra.mxu0 %v655
      %v1427 = vpop.f32.mrf.mxu0
      %v1428 = vadd.f32 %v1363, %v1427
      %v1429 = vpop.f32.mrf.mxu0
      %v1430 = vpop.f32.mrf.mxu0
      %v1431 = vadd.f32 %v1366, %v1430
      %v1432 = vpop.f32.mrf.mxu0
      %1433 = vmatprep.mubr.bf16.mxu0 0
      %1434 = vmatmul.mubr.bf16.gmra.mxu0 %v661
      %v1435 = vpop.f32.mrf.mxu0
      %v1436 = vadd.f32 %v1371, %v1435
      %v1437 = vpop.f32.mrf.mxu0
      %v1438 = vpop.f32.mrf.mxu0
      %v1439 = vadd.f32 %v1374, %v1438
      %v1440 = vpop.f32.mrf.mxu0
      %1441 = vmatprep.mubr.bf16.mxu0 0
      %1442 = vmatmul.mubr.bf16.gmra.mxu0 %v667
      %v1443 = vpop.f32.mrf.mxu0
      %v1444 = vadd.f32 %v1379, %v1443
      %v1445 = vpop.f32.mrf.mxu0
      %v1446 = vpop.f32.mrf.mxu0
      %v1447 = vadd.f32 %v1382, %v1446
      %v1448 = vpop.f32.mrf.mxu0
      %1449 = vmatprep.mubr.bf16.mxu0 0
      %1450 = vmatmul.mubr.bf16.gmra.mxu0 %v673
      %v1451 = vpop.f32.mrf.mxu0
      %v1452 = vadd.f32 %v1387, %v1451
      %v1453 = vpop.f32.mrf.mxu0
      %v1454 = vpop.f32.mrf.mxu0
      %v1455 = vadd.f32 %v1390, %v1454
      %v1456 = vpop.f32.mrf.mxu0
      %1457 = vdwg.mxu0
      %v1458 = vadd.f32 %v1428, %v1431
      %v1459 = vadd.f32 %v1458, %v1436
      %v1460 = vadd.f32 %v1459, %v1439
      %v1461 = vadd.f32 %v1460, %v1444
      %v1462 = vadd.f32 %v1461, %v1447
      %v1463 = vadd.f32 %v1462, %v1452
      %v1464 = vadd.f32 %v1463, %v1455
      %v1465 = vrot.slane %v1464, 4
      %v1466 = vadd.f32 %v1464, %v1465
      %v1467 = vrot.slane %v1466, 2
      %v1468 = vadd.f32 %v1466, %v1467
      %v1469 = vrot.slane %v1468, 1
      %v1470 = vadd.f32 %v1468, %v1469
      %v1471 = vadd.f32 %v1470, 0.0
      %v1472 = vmul.f32 %v1428, %v1428
      %v1473 = vmul.f32 %v1431, %v1431
      %v1474 = vmul.f32 %v1436, %v1436
      %v1475 = vmul.f32 %v1439, %v1439
      %v1476 = vmul.f32 %v1444, %v1444
      %v1477 = vmul.f32 %v1447, %v1447
      %v1478 = vmul.f32 %v1452, %v1452
      %v1479 = vmul.f32 %v1455, %v1455
      %v1480 = vadd.f32 %v1472, %v1473
      %v1481 = vadd.f32 %v1480, %v1474
      %v1482 = vadd.f32 %v1481, %v1475
      %v1483 = vadd.f32 %v1482, %v1476
      %v1484 = vadd.f32 %v1483, %v1477
      %v1485 = vadd.f32 %v1484, %v1478
      %v1486 = vadd.f32 %v1485, %v1479
      %v1487 = vrot.slane %v1486, 4
      %v1488 = vadd.f32 %v1486, %v1487
      %v1489 = vrot.slane %v1488, 2
      %v1490 = vadd.f32 %v1488, %v1489
      %v1491 = vrot.slane %v1490, 1
      %v1492 = vadd.f32 %v1490, %v1491
      %v1493 = vadd.f32 %v1492, 0.0
      %v1494 = vpack.c.bf16 %v1428, %v1428
      %v1495 = vpack.c.bf16 %v1431, %v1431
      %v1496 = vpack.c.bf16 %v1436, %v1436
      %v1497 = vpack.c.bf16 %v1439, %v1439
      %v1498 = vpack.c.bf16 %v1444, %v1444
      %v1499 = vpack.c.bf16 %v1447, %v1447
      %v1500 = vpack.c.bf16 %v1452, %v1452
      %v1501 = vpack.c.bf16 %v1455, %v1455
      %1502 = vst [vmem:[%s231] sm:$0xf] %v1494
      %1503 = vst [vmem:[%s231 + $0x4] sm:$0xf] %v1495
      %1504 = vst [vmem:[%s231 + $0x8] sm:$0xf] %v1496
      %1505 = vst [vmem:[%s231 + $0xc] sm:$0xf] %v1497
      %1506 = vst [vmem:[%s231 + $0x10] sm:$0xf] %v1498
      %1507 = vst [vmem:[%s231 + $0x14] sm:$0xf] %v1499
      %1508 = vst [vmem:[%s231 + $0x18] sm:$0xf] %v1500
      %1509 = vst [vmem:[%s231 + $0x1c] sm:$0xf] %v1501
      %vm1510 = vcmask 1040384
      %v1511 = vsel %vm1510, %v1471, %v1493
      %1512 = vst [vmem:[%s235] sm:$0x3] %v1511
      %p1513 = scmp.lt.s32.totalorder %s17, 1
      %s1514 = scalar_select %p1513, %s17, 1
      %s1515 = smul.addr %s1514, 8
      %s1516 = smul.addr %s1515, 4
      %s1517 = scalar_lea.vmem %s4, %s1516
      %p1518 = scmp.lt.s32.totalorder %s17, 1
      %s1519 = scalar_select %p1518, %s17, 1
      %s1520 = smul.addr %s1519, 2
      %s1521 = scalar_lea.vmem %s5, %s1520
      // Predicated region
      $region37: #{down_block.4} parent=35 // pred_check
        %p1522 = pneg %p124
      $region38: #{down_block.4} parent=35 // pred_check_branch
        %1524 = sbr.rel (%p1522) target = $region40
      $region39: #{down_block.4} parent=35 // pred_region
        _
      $region40: #{down_block.4} parent=35 // pred_fallthru
        _
      // Predicated region
      $region41: #{down_block.4} parent=35 // pred_check
        %p1525 = pneg %p150
      $region42: #{down_block.4} parent=35 // pred_check_branch
        %1527 = sbr.rel (%p1525) target = $region44
      $region43: #{down_block.4} parent=35 // pred_region
        _
      $region44: #{down_block.4} parent=35 // pred_fallthru
        _
    $region36: #{down_block.4} parent=5 // pred_fallthru
      _
    %p1528 = scmp.le.s32.totalorder 2, %s12
    // Predicated region
    $region45: #{down_block.4} parent=5 // pred_check
      %p1529 = pneg %p1528
    $region46: #{down_block.4} parent=5 // pred_check_branch
      %1531 = sbr.rel (%p1529) target = $region48
    $region47: #{down_block.4} parent=5 // pred_region
      %s1532 = ssub.s32 %s12, 2
      // Predicated region
      $region49: #{down_block.4} parent=47 // pred_check
        %p1533 = pneg %p130
      $region50: #{down_block.4} parent=47 // pred_check_branch
        %1535 = sbr.rel (%p1533) target = $region52
      $region51: #{down_block.4} parent=47 // pred_region
        %p1536 = scmp.lt.s32.totalorder %s18, 1
        %s1537 = scalar_select %p1536, %s18, 1
        %s1538 = smul.addr %s1537, 8
        %s1539 = smul.addr %s1538, 4
        %s1540 = scalar_lea.vmem %s4, %s1539
      $region52: #{down_block.4} parent=47 // pred_fallthru
        _
      // Predicated region
      $region53: #{down_block.4} parent=47 // pred_check
        %p1541 = pneg %p156
      $region54: #{down_block.4} parent=47 // pred_check_branch
        %1543 = sbr.rel (%p1541) target = $region56
      $region55: #{down_block.4} parent=47 // pred_region
        %p1544 = scmp.lt.s32.totalorder %s18, 1
        %s1545 = scalar_select %p1544, %s18, 1
        %s1546 = smul.addr %s1545, 2
        %s1547 = scalar_lea.vmem %s5, %s1546
      $region56: #{down_block.4} parent=47 // pred_fallthru
        _
    $region48: #{down_block.4} parent=5 // pred_fallthru
      _
  $region6: #{down_block.4} parent=0 // loop_footer
    %s16 = sadd.s32 1, %s12
  $region7: #{down_block.4} parent=0 // loop_footer_branch
    %11 = sbr.rel target = $region3
  $region8: #{down_block.4} parent=0 // loop_exit
    _

</llo_original>
